<compile_context>
chip_gen: v5e
topology: v5e:2x2
jax: 0.10.0
libtpu: 0.0.40
codegen_flags: <defaults>
</compile_context>

<pallas_src>
import functools

import jax
import jax.numpy as jnp
from jax.experimental import pallas as pl
from jax.experimental.pallas import tpu as pltpu

LN_EPS = 1e-5
NEG_SLOPE = 0.01            # F.leaky_relu default
H1, H2, H3 = 128, 256, 64   # fixed by the module architecture
OUT_PAD = 128               # lane-dense output width
ROW_PAD = 2 * H2            # packed small-parameter row width (fits bk|bq)


def _leaky(v):
    # exact leaky_relu(negative_slope=0.01) for every sign of v
    return jnp.maximum(v, NEG_SLOPE * v)


def _gcn_kernel(x_ref, edge_ref, w1res_ref, w2_ref, wkq_ref, w3_ref, wfc_ref,
                small_ref, out_ref, *, apply_sigmoid):
    f32 = jnp.float32
    bf16 = jnp.bfloat16

    x0 = x_ref[...]                                   # [G, N, F]
    g, n, f_in = x0.shape
    edge = edge_ref[...]                              # [G, 2, E] int32
    e = edge.shape[2]

    # ---- packed small parameters (one aligned [8, 512] buffer) ----
    small = small_ref[...]
    b1   = small[0:1, :H1]
    b2   = small[1:2, :H2]
    bkq  = small[2:3, :]                              # bk | bq, [1, 512]
    b3   = small[3:4, :H3]
    bres = small[4:5, :H3]
    ln_w = small[5:6, :H3]
    ln_b = small[6:7, :H3]
    bfc  = small[7:8, :OUT_PAD]

    w1res = w1res_ref[...]
    w1, wres = w1res[:, :H1], w1res[:, H1:]           # [F,128], [F,64]
    w2 = w2_ref[...]                                  # [128, 256]  (bug fix)
    wkq = wkq_ref[...]                                # [256, 512]  (Wk | Wq fused)
    w3 = w3_ref[...]                                  # [256, 64]
    wfc = wfc_ref[...]                                # [64, 128]   (lane-padded)

    # ---- dense A_hat and attention mask from edge_index (no XLA scatter) ----
    src = edge[:, 0:1, :]                             # [G, 1, E]
    dst = edge[:, 1:2, :]                             # [G, 1, E]
    iota_n = jax.lax.broadcasted_iota(jnp.int32, (g, n, e), 1)
    # one-hots in bf16: edge counts are small integers (exact in bf16) and the
    # adjacency / mask builds then take the native bf16 MXU path.
    src1h = (src == iota_n).astype(bf16)              # [G, N, E]
    dst1h = (dst == iota_n).astype(bf16)              # [G, N, E]
    a_cnt = jnp.einsum('gie,gje->gij', dst1h, src1h,
                       preferred_element_type=f32)    # counts A[dst, src]
    # m_cnt is a_cnt^T per graph; computing it with a second tiny bf16 matmul
    # (instead of an [N,N] transpose) also yields the lane-layout degrees below
    # with a plain sublane reduction -- no transpose anywhere on this path.
    m_cnt = jnp.einsum('gie,gje->gij', src1h, dst1h,
                       preferred_element_type=f32)    # counts mask[src, dst]
    mask = (m_cnt > 0.0).astype(f32)                  # binary attention mask

    ii = jax.lax.broadcasted_iota(jnp.int32, (n, n), 0)
    jj = jax.lax.broadcasted_iota(jnp.int32, (n, n), 1)
    eye = (ii == jj).astype(f32)
    a_self = a_cnt + eye                              # A + I (duplicate edges add)

    # D^-1/2 (A+I) D^-1/2 materialized ONCE per step.
    deg_row = jnp.sum(a_self, axis=2, keepdims=True)            # [G, N, 1]
    deg_col = jnp.sum(m_cnt, axis=1, keepdims=True) + 1.0       # [G, 1, N]
    a_hat = jax.lax.rsqrt(deg_row) * a_self * jax.lax.rsqrt(deg_col)

    def propagate(m):                                 # [G, N, D] -> [G, N, D]
        return jnp.einsum('gij,gjd->gid', a_hat, m, preferred_element_type=f32)

    x_flat = x0.reshape(g * n, f_in)

    # ---- residual projection of the raw features ----
    residual = jnp.dot(x_flat, wres, preferred_element_type=f32) + bres   # [G*N, 64]

    # ---- GCNConv 1 / 2 (aggregate first; nodes flattened so matmuls fill MXU rows)
    h = propagate(x0).reshape(g * n, f_in)
    h = _leaky(jnp.dot(h, w1, preferred_element_type=f32) + b1)           # [G*N,128]
    # TODO(synk): Dropout(p=0.5) is training-time stochastic; eval mode = identity.
    h = propagate(h.reshape(g, n, H1)).reshape(g * n, H1)
    h = _leaky(jnp.dot(h, w2, preferred_element_type=f32) + b2)           # [G*N,256]

    # ---- masked node self-attention (softmax stays strictly per graph) ----
    kq = jnp.dot(h, wkq, preferred_element_type=f32) + bkq                # [G*N,512]
    keys = kq[:, :H2].reshape(g, n, H2)
    qrys = kq[:, H2:].reshape(g, n, H2)
    scores = jnp.einsum('gqd,gkd->gqk', qrys, keys,
                        preferred_element_type=f32)                       # [G, N, N]
    scores = scores * mask                            # multiplicative mask, as in spec
    scores = scores - jnp.max(scores, axis=-1, keepdims=True)
    p = jnp.exp(scores)
    # NOTE: pl.reciprocal(denom, approx=True) would move this divide to the EUP,
    # but it has not been re-validated against the 2e-4 tolerance; keep exact.
    attn = p / jnp.sum(p, axis=-1, keepdims=True)
    h = jnp.einsum('gij,gjd->gid', attn, h.reshape(g, n, H2),
                   preferred_element_type=f32)                            # [G,N,256]

    # ---- GCNConv 3 (transform first: 256 -> 64 before the NxN aggregation) ----
    h = jnp.dot(h.reshape(g * n, H2), w3, preferred_element_type=f32)     # [G*N, 64]
    h = _leaky(propagate(h.reshape(g, n, H3)).reshape(g * n, H3) + b3)

    # ---- residual add + LayerNorm(64) ----
    h = h + residual
    mu = jnp.mean(h, axis=-1, keepdims=True)
    hc = h - mu
    var = jnp.mean(hc * hc, axis=-1, keepdims=True)
    h = hc * jax.lax.rsqrt(var + LN_EPS) * ln_w + ln_b                    # [G*N, 64]

    # ---- max pooling over nodes + final Linear (sublane+lane dense store) ----
    pooled = jnp.max(h.reshape(g, n, H3), axis=1)                         # [G, 64]
    emb = jnp.dot(pooled, wfc, preferred_element_type=f32) + bfc          # [G, 128]
    if apply_sigmoid:
        emb = jax.nn.sigmoid(emb)
    out_ref[...] = emb                                                    # [G, 128]


def _graphs_per_step(b, n, target_rows=256):
    """Largest divisor G of B with G*N <= ~256 rows and (for v7x) >= 2 grid steps.

    target_rows=256 fills the 256x256 MXU on v6e/v7x (multiple of 128 for v5e)
    while keeping the quadratic [G, N, N] adjacency/score temporaries far below
    even v7x's 64 MiB VMEM.
    """
    target = max(1, target_rows // max(n, 1))
    best = 1
    for cand in range(1, b + 1):
        if b % cand != 0 or cand > target:
            continue
        if b // cand >= 2 or b == 1:     # keep >=2 parallel steps for v7x dual-TC
            best = cand
    return best


def gcn_forward(x, edge_index, params, output_dim):
    """x: [B, N, F] float32; edge_index: [B, 2, E] int32 (src, dst)."""
    b, n, f = x.shape
    e = edge_index.shape[-1]
    assert output_dim <= OUT_PAD

    g = _graphs_per_step(b, n)
    steps = b // g

    # ---- host-side parameter packing (few aligned buffers, grid-resident) ----
    w1res = jnp.concatenate([params["w1"], params["wres"]], axis=1)      # [F, 192]
    wkq = jnp.concatenate([params["wk"], params["wq"]], axis=1)          # [256, 512]
    wfc_p = jnp.pad(params["wfc"],
                    ((0, 0), (0, OUT_PAD - params["wfc"].shape[1])))     # [64, 128]

    def row(v):
        v = v.reshape(1, -1)
        return jnp.pad(v, ((0, 0), (0, ROW_PAD - v.shape[1])))

    bkq = jnp.concatenate([params["bk"].reshape(1, -1),
                           params["bq"].reshape(1, -1)], axis=1)         # [1, 512]
    small = jnp.concatenate(
        [row(params["b1"]), row(params["b2"]), row(bkq), row(params["b3"]),
         row(params["bres"]), row(params["ln_w"]), row(params["ln_b"]),
         row(params["bfc"])], axis=0)                                    # [8, 512]

    # ---- advisory cost estimate so XLA can schedule around the custom call ----
    flops_graph = 2 * (2 * n * e * n                  # one-hot adjacency/mask builds
                       + n * n * f + n * f * H1       # layer 1
                       + n * n * H1 + n * H1 * H2     # layer 2
                       + n * H2 * 2 * H2              # fused key|query
                       + 2 * n * n * H2               # scores + attn @ h
                       + n * H2 * H3 + n * n * H3     # layer 3
                       + n * f * H3                   # residual proj
                       + H3 * OUT_PAD)                # final linear
    bytes_accessed = 4 * (int(x.size) + int(edge_index.size) + int(w1res.size)
                          + int(params["w2"].size) + int(wkq.size)
                          + int(params["w3"].size) + int(wfc_p.size)
                          + int(small.size) + b * OUT_PAD)
    cost = pl.CostEstimate(flops=int(b * flops_graph),
                           transcendentals=int(b * (n * n + 4 * n)),
                           bytes_accessed=int(bytes_accessed))

    kernel = functools.partial(_gcn_kernel, apply_sigmoid=(output_dim == 1))

    grid_spec = pltpu.PrefetchScalarGridSpec(
        num_scalar_prefetch=0,
        grid=(steps,),
        in_specs=[
            pl.BlockSpec((g, n, f), lambda i: (i, 0, 0)),        # x (G graphs/step)
            pl.BlockSpec((g, 2, e), lambda i: (i, 0, 0)),        # edge_index
            pl.BlockSpec(w1res.shape, lambda i: (0, 0)),         # W1 | Wres
            pl.BlockSpec(params["w2"].shape, lambda i: (0, 0)),  # W2
            pl.BlockSpec(wkq.shape, lambda i: (0, 0)),           # Wk | Wq (fused)
            pl.BlockSpec(params["w3"].shape, lambda i: (0, 0)),  # W3
            pl.BlockSpec(wfc_p.shape, lambda i: (0, 0)),         # Wfc (lane-padded)
            pl.BlockSpec(small.shape, lambda i: (0, 0)),         # packed small params
        ],
        out_specs=pl.BlockSpec((None, g, OUT_PAD), lambda i: (i, 0, 0)),
    )

    out = pl.pallas_call(
        kernel,
        out_shape=jax.ShapeDtypeStruct((steps, g, OUT_PAD), jnp.float32),
        grid_spec=grid_spec,
        compiler_params=pltpu.CompilerParams(
            dimension_semantics=("parallel",)),
        cost_estimate=cost,
    )(x, edge_index, w1res, params["w2"], wkq, params["w3"], wfc_p, small)

    return out.reshape(b, OUT_PAD)[:, :output_dim]


def _reference_single(x, edge_index, params, output_dim):
    """Pure-JAX reference for one graph, mirroring the PyTorch forward."""
    n = x.shape[0]
    src, dst = edge_index[0], edge_index[1]
    a = jnp.zeros((n, n), jnp.float32).at[dst, src].add(1.0)
    a = a + jnp.eye(n, dtype=jnp.float32)
    dinv = jax.lax.rsqrt(jnp.sum(a, axis=1))
    a_hat = dinv[:, None] * a * dinv[None, :]

    residual = x @ params["wres"] + params["bres"]
    h = _leaky(a_hat @ (x @ params["w1"]) + params["b1"])
    h = _leaky(a_hat @ (h @ params["w2"]) + params["b2"])
    keys = h @ params["wk"] + params["bk"]
    qrys = h @ params["wq"] + params["bq"]
    scores = qrys @ keys.T
    mask = jnp.zeros((n, n), jnp.float32).at[src, dst].set(1.0)
    attn = jax.nn.softmax(scores * mask, axis=-1)
    h = attn @ h
    h = _leaky(a_hat @ (h @ params["w3"]) + params["b3"])
    h = h + residual
    mu = jnp.mean(h, axis=-1, keepdims=True)
    var = jnp.mean((h - mu) ** 2, axis=-1, keepdims=True)
    h = (h - mu) / jnp.sqrt(var + LN_EPS) * params["ln_w"] + params["ln_b"]
    pooled = jnp.max(h, axis=0)
    out = pooled @ params["wfc"] + params["bfc"].reshape(-1)
    if output_dim == 1:
        out = jax.nn.sigmoid(out)
    return out


if __name__ == "__main__":
    B, N, INPUT_DIM, OUTPUT_DIM = 4, 16, 8, 16
    E = 2 * N

    key = jax.random.PRNGKey(0)
    ks = jax.random.split(key, 20)

    def rand(k, shape, scale=0.1):
        return scale * jax.random.normal(k, shape, jnp.float32)

    # weights stored transposed relative to torch nn.Linear ([in, out])
    params = {
        "w1":  rand(ks[0], (INPUT_DIM, H1)),   "b1":  rand(ks[1], (1, H1)),
        "w2":  rand(ks[2], (H1, H2)),          "b2":  rand(ks[3], (1, H2)),
        "w3":  rand(ks[4], (H2, H3)),          "b3":  rand(ks[5], (1, H3)),
        "wk":  rand(ks[6], (H2, H2), 0.05),    "bk":  rand(ks[7], (1, H2), 0.05),
        "wq":  rand(ks[8], (H2, H2), 0.05),    "bq":  rand(ks[9], (1, H2), 0.05),
        "wres": rand(ks[10], (INPUT_DIM, H3)), "bres": rand(ks[11], (1, H3)),
        "ln_w": 1.0 + rand(ks[12], (1, H3)),   "ln_b": rand(ks[13], (1, H3)),
        "wfc": rand(ks[14], (H3, OUTPUT_DIM)), "bfc": rand(ks[15], (1, OUTPUT_DIM)),
    }

    x = jax.random.normal(ks[16], (B, N, INPUT_DIM), jnp.float32)

    # deterministic bidirectional ring graphs with a different stride per graph
    base = jnp.arange(N, dtype=jnp.int32)
    edge_list = []
    for gb in range(B):
        nb = (base + 1 + gb) % N
        src = jnp.concatenate([base, nb])
        dst = jnp.concatenate([nb, base])
        edge_list.append(jnp.stack([src, dst], axis=0))          # [2, 2N]
    edge_index = jnp.stack(edge_list, axis=0).astype(jnp.int32)  # [B, 2, E]

    emb = gcn_forward(x, edge_index, params, OUTPUT_DIM)
    emb = jax.block_until_ready(emb)

    ref = jnp.stack([_reference_single(x[gb], edge_index[gb], params, OUTPUT_DIM)
                     for gb in range(B)])
    assert emb.shape == (B, OUTPUT_DIM), emb.shape
    assert jnp.allclose(emb, ref, atol=2e-4, rtol=2e-4), (emb, ref)
    print("KERNEL_OK")
</pallas_src>

<mosaic_0001>
module attributes {stable_mosaic.version = 11 : i64} {
  func.func @_gcn_kernel(%arg0: i32, %arg1: memref<2x16x8xf32, #tpu.memory_space<vmem>>, %arg2: memref<2x2x32xi32, #tpu.memory_space<vmem>>, %arg3: memref<8x192xf32, #tpu.memory_space<vmem>>, %arg4: memref<128x256xf32, #tpu.memory_space<vmem>>, %arg5: memref<256x512xf32, #tpu.memory_space<vmem>>, %arg6: memref<256x64xf32, #tpu.memory_space<vmem>>, %arg7: memref<64x128xf32, #tpu.memory_space<vmem>>, %arg8: memref<8x512xf32, #tpu.memory_space<vmem>>, %arg9: memref<1x2x128xf32, #tpu.memory_space<vmem>>) attributes {dimension_semantics = [#tpu.dimension_semantics<parallel>], iteration_bounds = array<i64: 2>, scalar_prefetch = 0 : i64, scratch_operands = 0 : i64, tpu.core_type = #tpu.core_type<tc>, window_params = [{transform_indices = @transform_0, window_bounds = array<i64: 2, 16, 8>}, {transform_indices = @transform_1, window_bounds = array<i64: 2, 2, 32>}, {pipeline_mode = #tpu.pipeline_mode<synchronous>, transform_indices = @transform_2, window_bounds = array<i64: 8, 192>}, {pipeline_mode = #tpu.pipeline_mode<synchronous>, transform_indices = @transform_3, window_bounds = array<i64: 128, 256>}, {pipeline_mode = #tpu.pipeline_mode<synchronous>, transform_indices = @transform_4, window_bounds = array<i64: 256, 512>}, {pipeline_mode = #tpu.pipeline_mode<synchronous>, transform_indices = @transform_5, window_bounds = array<i64: 256, 64>}, {pipeline_mode = #tpu.pipeline_mode<synchronous>, transform_indices = @transform_6, window_bounds = array<i64: 64, 128>}, {pipeline_mode = #tpu.pipeline_mode<synchronous>, transform_indices = @transform_7, window_bounds = array<i64: 8, 512>}, {transform_indices = @transform_8, window_bounds = array<i64: 1, 2, 128>}]} {
    %c0 = arith.constant 0 : index
    %c0_0 = arith.constant 0 : index
    %c0_1 = arith.constant 0 : index
    %0 = vector.load %arg1[%c0, %c0_0, %c0_1] : memref<2x16x8xf32, #tpu.memory_space<vmem>>, vector<2x16x8xf32>
    %c0_2 = arith.constant 0 : index
    %c0_3 = arith.constant 0 : index
    %c0_4 = arith.constant 0 : index
    %1 = vector.load %arg2[%c0_2, %c0_3, %c0_4] : memref<2x2x32xi32, #tpu.memory_space<vmem>>, vector<2x2x32xi32>
    %c0_5 = arith.constant 0 : index
    %c0_6 = arith.constant 0 : index
    %2 = vector.load %arg8[%c0_5, %c0_6] : memref<8x512xf32, #tpu.memory_space<vmem>>, vector<8x512xf32>
    %3 = vector.extract_strided_slice %2 {offsets = [0, 0], sizes = [1, 128], strides = [1, 1]} : vector<8x512xf32> to vector<1x128xf32>
    %4 = vector.extract_strided_slice %2 {offsets = [1, 0], sizes = [1, 256], strides = [1, 1]} : vector<8x512xf32> to vector<1x256xf32>
    %5 = vector.extract_strided_slice %2 {offsets = [2, 0], sizes = [1, 512], strides = [1, 1]} : vector<8x512xf32> to vector<1x512xf32>
    %6 = vector.extract_strided_slice %2 {offsets = [3, 0], sizes = [1, 64], strides = [1, 1]} : vector<8x512xf32> to vector<1x64xf32>
    %7 = vector.extract_strided_slice %2 {offsets = [4, 0], sizes = [1, 64], strides = [1, 1]} : vector<8x512xf32> to vector<1x64xf32>
    %8 = vector.extract_strided_slice %2 {offsets = [5, 0], sizes = [1, 64], strides = [1, 1]} : vector<8x512xf32> to vector<1x64xf32>
    %9 = vector.extract_strided_slice %2 {offsets = [6, 0], sizes = [1, 64], strides = [1, 1]} : vector<8x512xf32> to vector<1x64xf32>
    %10 = vector.extract_strided_slice %2 {offsets = [7, 0], sizes = [1, 128], strides = [1, 1]} : vector<8x512xf32> to vector<1x128xf32>
    %c0_7 = arith.constant 0 : index
    %c0_8 = arith.constant 0 : index
    %11 = vector.load %arg3[%c0_7, %c0_8] : memref<8x192xf32, #tpu.memory_space<vmem>>, vector<8x192xf32>
    %12 = vector.extract_strided_slice %11 {offsets = [0, 0], sizes = [8, 128], strides = [1, 1]} : vector<8x192xf32> to vector<8x128xf32>
    %13 = vector.extract_strided_slice %11 {offsets = [0, 128], sizes = [8, 64], strides = [1, 1]} : vector<8x192xf32> to vector<8x64xf32>
    %c0_9 = arith.constant 0 : index
    %c0_10 = arith.constant 0 : index
    %14 = vector.load %arg4[%c0_9, %c0_10] : memref<128x256xf32, #tpu.memory_space<vmem>>, vector<128x256xf32>
    %c0_11 = arith.constant 0 : index
    %c0_12 = arith.constant 0 : index
    %15 = vector.load %arg5[%c0_11, %c0_12] : memref<256x512xf32, #tpu.memory_space<vmem>>, vector<256x512xf32>
    %c0_13 = arith.constant 0 : index
    %c0_14 = arith.constant 0 : index
    %16 = vector.load %arg6[%c0_13, %c0_14] : memref<256x64xf32, #tpu.memory_space<vmem>>, vector<256x64xf32>
    %c0_15 = arith.constant 0 : index
    %c0_16 = arith.constant 0 : index
    %17 = vector.load %arg7[%c0_15, %c0_16] : memref<64x128xf32, #tpu.memory_space<vmem>>, vector<64x128xf32>
    %18 = vector.extract_strided_slice %1 {offsets = [0, 0, 0], sizes = [2, 1, 32], strides = [1, 1, 1]} : vector<2x2x32xi32> to vector<2x1x32xi32>
    %19 = vector.extract_strided_slice %1 {offsets = [0, 1, 0], sizes = [2, 1, 32], strides = [1, 1, 1]} : vector<2x2x32xi32> to vector<2x1x32xi32>
    %20 = tpu.iota {dimensions = array<i32: 1>} : vector<2x16x32xi32>
    %21 = vector.broadcast %18 : vector<2x1x32xi32> to vector<2x16x32xi32>
    %22 = arith.cmpi eq, %21, %20 : vector<2x16x32xi32>
    %23 = arith.extui %22 : vector<2x16x32xi1> to vector<2x16x32xi32>
    %24 = arith.sitofp %23 : vector<2x16x32xi32> to vector<2x16x32xf32>
    %25 = arith.truncf %24 : vector<2x16x32xf32> to vector<2x16x32xbf16>
    %26 = vector.broadcast %19 : vector<2x1x32xi32> to vector<2x16x32xi32>
    %27 = arith.cmpi eq, %26, %20 : vector<2x16x32xi32>
    %28 = arith.extui %27 : vector<2x16x32xi1> to vector<2x16x32xi32>
    %29 = arith.sitofp %28 : vector<2x16x32xi32> to vector<2x16x32xf32>
    %30 = arith.truncf %29 : vector<2x16x32xf32> to vector<2x16x32xbf16>
    "tpu.trace_start"() <{level = 10 : i32, message = "gie,gje->gij"}> : () -> ()
    %cst = arith.constant dense<0.000000e+00> : vector<2x16x16xf32>
    %31 = tpu.matmul %30, %25, %cst {dimension_numbers = #tpu.dot_dimension_numbers<[2], [2], [1], [1], [0, 0, 0, 1, 1, 1], [0], [0]>} : vector<2x16x32xbf16>, vector<2x16x32xbf16>, vector<2x16x16xf32> -> vector<2x16x16xf32>
    %cst_17 = arith.constant dense<0.000000e+00> : vector<2x16x16xf32>
    %32 = tpu.matmul %25, %30, %cst_17 {dimension_numbers = #tpu.dot_dimension_numbers<[2], [2], [1], [1], [0, 0, 0, 1, 1, 1], [0], [0]>} : vector<2x16x32xbf16>, vector<2x16x32xbf16>, vector<2x16x16xf32> -> vector<2x16x16xf32>
    %cst_18 = arith.constant 0.000000e+00 : f32
    "tpu.trace_stop"() : () -> ()
    %33 = vector.broadcast %cst_18 : f32 to vector<2x16x16xf32>
    %34 = arith.cmpf ogt, %32, %33 : vector<2x16x16xf32>
    %35 = arith.extui %34 : vector<2x16x16xi1> to vector<2x16x16xi32>
    %36 = arith.sitofp %35 : vector<2x16x16xi32> to vector<2x16x16xf32>
    %37 = tpu.iota {dimensions = array<i32: 0>} : vector<16x16xi32>
    %38 = tpu.iota {dimensions = array<i32: 1>} : vector<16x16xi32>
    %39 = arith.cmpi eq, %37, %38 : vector<16x16xi32>
    %40 = arith.extui %39 : vector<16x16xi1> to vector<16x16xi32>
    %41 = arith.sitofp %40 : vector<16x16xi32> to vector<16x16xf32>
    %42 = vector.shape_cast %41 : vector<16x16xf32> to vector<1x16x16xf32>
    %43 = vector.broadcast %42 : vector<1x16x16xf32> to vector<2x16x16xf32>
    %44 = arith.addf %31, %43 : vector<2x16x16xf32>
    %cst_19 = arith.constant dense<0.000000e+00> : vector<2x16xf32>
    %45 = vector.multi_reduction <add>, %44, %cst_19 [2] : vector<2x16x16xf32> to vector<2x16xf32>
    %46 = vector.shape_cast %45 : vector<2x16xf32> to vector<2x16x1xf32>
    %cst_20 = arith.constant dense<0.000000e+00> : vector<2x16xf32>
    %47 = vector.multi_reduction <add>, %32, %cst_20 [1] : vector<2x16x16xf32> to vector<2x16xf32>
    %48 = vector.shape_cast %47 : vector<2x16xf32> to vector<2x1x16xf32>
    %cst_21 = arith.constant 1.000000e+00 : f32
    %49 = vector.broadcast %cst_21 : f32 to vector<2x1x16xf32>
    %50 = arith.addf %48, %49 : vector<2x1x16xf32>
    %51 = math.rsqrt %46 : vector<2x16x1xf32>
    %52 = vector.broadcast %51 : vector<2x16x1xf32> to vector<2x16x16xf32>
    %53 = arith.mulf %52, %44 : vector<2x16x16xf32>
    %54 = math.rsqrt %50 : vector<2x1x16xf32>
    %55 = vector.broadcast %54 : vector<2x1x16xf32> to vector<2x16x16xf32>
    %56 = arith.mulf %53, %55 : vector<2x16x16xf32>
    %57 = vector.shape_cast %0 : vector<2x16x8xf32> to vector<32x8xf32>
    %cst_22 = arith.constant dense<0.000000e+00> : vector<32x64xf32>
    %58 = tpu.matmul %57, %13, %cst_22 {dimension_numbers = #tpu.dot_dimension_numbers<[1], [0], [0], [1], [0, 0, 1, 1], [], []>} : vector<32x8xf32>, vector<8x64xf32>, vector<32x64xf32> -> vector<32x64xf32>
    %59 = vector.broadcast %7 : vector<1x64xf32> to vector<32x64xf32>
    %60 = arith.addf %58, %59 : vector<32x64xf32>
    "tpu.trace_start"() <{level = 10 : i32, message = "gij,gjd->gid"}> : () -> ()
    %cst_23 = arith.constant dense<0.000000e+00> : vector<2x16x8xf32>
    %61 = tpu.matmul %56, %0, %cst_23 {dimension_numbers = #tpu.dot_dimension_numbers<[2], [1], [1], [2], [0, 0, 0, 1, 1, 2], [0], [0]>} : vector<2x16x16xf32>, vector<2x16x8xf32>, vector<2x16x8xf32> -> vector<2x16x8xf32>
    "tpu.trace_stop"() : () -> ()
    %62 = vector.shape_cast %61 : vector<2x16x8xf32> to vector<32x8xf32>
    %cst_24 = arith.constant dense<0.000000e+00> : vector<32x128xf32>
    %63 = tpu.matmul %62, %12, %cst_24 {dimension_numbers = #tpu.dot_dimension_numbers<[1], [0], [0], [1], [0, 0, 1, 1], [], []>} : vector<32x8xf32>, vector<8x128xf32>, vector<32x128xf32> -> vector<32x128xf32>
    %64 = vector.broadcast %3 : vector<1x128xf32> to vector<32x128xf32>
    %65 = arith.addf %63, %64 : vector<32x128xf32>
    %cst_25 = arith.constant 0.00999999977 : f32
    %66 = vector.broadcast %cst_25 : f32 to vector<32x128xf32>
    %67 = arith.mulf %66, %65 : vector<32x128xf32>
    %68 = arith.maximumf %65, %67 : vector<32x128xf32>
    %69 = vector.shape_cast %68 : vector<32x128xf32> to vector<2x16x128xf32>
    "tpu.trace_start"() <{level = 10 : i32, message = "gij,gjd->gid"}> : () -> ()
    %cst_26 = arith.constant dense<0.000000e+00> : vector<2x16x128xf32>
    %70 = tpu.matmul %56, %69, %cst_26 {dimension_numbers = #tpu.dot_dimension_numbers<[2], [1], [1], [2], [0, 0, 0, 1, 1, 2], [0], [0]>} : vector<2x16x16xf32>, vector<2x16x128xf32>, vector<2x16x128xf32> -> vector<2x16x128xf32>
    "tpu.trace_stop"() : () -> ()
    %71 = vector.shape_cast %70 : vector<2x16x128xf32> to vector<32x128xf32>
    %cst_27 = arith.constant dense<0.000000e+00> : vector<32x256xf32>
    %72 = tpu.matmul %71, %14, %cst_27 {dimension_numbers = #tpu.dot_dimension_numbers<[1], [0], [0], [1], [0, 0, 1, 1], [], []>} : vector<32x128xf32>, vector<128x256xf32>, vector<32x256xf32> -> vector<32x256xf32>
    %73 = vector.broadcast %4 : vector<1x256xf32> to vector<32x256xf32>
    %74 = arith.addf %72, %73 : vector<32x256xf32>
    %cst_28 = arith.constant 0.00999999977 : f32
    %75 = vector.broadcast %cst_28 : f32 to vector<32x256xf32>
    %76 = arith.mulf %75, %74 : vector<32x256xf32>
    %77 = arith.maximumf %74, %76 : vector<32x256xf32>
    %cst_29 = arith.constant dense<0.000000e+00> : vector<32x512xf32>
    %78 = tpu.matmul %77, %15, %cst_29 {dimension_numbers = #tpu.dot_dimension_numbers<[1], [0], [0], [1], [0, 0, 1, 1], [], []>} : vector<32x256xf32>, vector<256x512xf32>, vector<32x512xf32> -> vector<32x512xf32>
    %79 = vector.broadcast %5 : vector<1x512xf32> to vector<32x512xf32>
    %80 = arith.addf %78, %79 : vector<32x512xf32>
    %81 = vector.extract_strided_slice %80 {offsets = [0, 0], sizes = [32, 256], strides = [1, 1]} : vector<32x512xf32> to vector<32x256xf32>
    %82 = vector.shape_cast %81 : vector<32x256xf32> to vector<2x16x256xf32>
    %83 = vector.extract_strided_slice %80 {offsets = [0, 256], sizes = [32, 256], strides = [1, 1]} : vector<32x512xf32> to vector<32x256xf32>
    %84 = vector.shape_cast %83 : vector<32x256xf32> to vector<2x16x256xf32>
    "tpu.trace_start"() <{level = 10 : i32, message = "gqd,gkd->gqk"}> : () -> ()
    %cst_30 = arith.constant dense<0.000000e+00> : vector<2x16x16xf32>
    %85 = tpu.matmul %84, %82, %cst_30 {dimension_numbers = #tpu.dot_dimension_numbers<[2], [2], [1], [1], [0, 0, 0, 1, 1, 1], [0], [0]>} : vector<2x16x256xf32>, vector<2x16x256xf32>, vector<2x16x16xf32> -> vector<2x16x16xf32>
    "tpu.trace_stop"() : () -> ()
    %86 = arith.mulf %85, %36 : vector<2x16x16xf32>
    %cst_31 = arith.constant dense<0xFF800000> : vector<2x16xf32>
    %87 = vector.multi_reduction <maximumf>, %86, %cst_31 [2] : vector<2x16x16xf32> to vector<2x16xf32>
    %88 = vector.shape_cast %87 : vector<2x16xf32> to vector<2x16x1xf32>
    %89 = vector.broadcast %88 : vector<2x16x1xf32> to vector<2x16x16xf32>
    %90 = arith.subf %86, %89 : vector<2x16x16xf32>
    %91 = math.exp %90 : vector<2x16x16xf32>
    %cst_32 = arith.constant dense<0.000000e+00> : vector<2x16xf32>
    %92 = vector.multi_reduction <add>, %91, %cst_32 [2] : vector<2x16x16xf32> to vector<2x16xf32>
    %93 = vector.shape_cast %92 : vector<2x16xf32> to vector<2x16x1xf32>
    %94 = vector.broadcast %93 : vector<2x16x1xf32> to vector<2x16x16xf32>
    %95 = arith.divf %91, %94 : vector<2x16x16xf32>
    %96 = vector.shape_cast %77 : vector<32x256xf32> to vector<2x16x256xf32>
    "tpu.trace_start"() <{level = 10 : i32, message = "gij,gjd->gid"}> : () -> ()
    %cst_33 = arith.constant dense<0.000000e+00> : vector<2x16x256xf32>
    %97 = tpu.matmul %95, %96, %cst_33 {dimension_numbers = #tpu.dot_dimension_numbers<[2], [1], [1], [2], [0, 0, 0, 1, 1, 2], [0], [0]>} : vector<2x16x16xf32>, vector<2x16x256xf32>, vector<2x16x256xf32> -> vector<2x16x256xf32>
    "tpu.trace_stop"() : () -> ()
    %98 = vector.shape_cast %97 : vector<2x16x256xf32> to vector<32x256xf32>
    %cst_34 = arith.constant dense<0.000000e+00> : vector<32x64xf32>
    %99 = tpu.matmul %98, %16, %cst_34 {dimension_numbers = #tpu.dot_dimension_numbers<[1], [0], [0], [1], [0, 0, 1, 1], [], []>} : vector<32x256xf32>, vector<256x64xf32>, vector<32x64xf32> -> vector<32x64xf32>
    %100 = vector.shape_cast %99 : vector<32x64xf32> to vector<2x16x64xf32>
    "tpu.trace_start"() <{level = 10 : i32, message = "gij,gjd->gid"}> : () -> ()
    %cst_35 = arith.constant dense<0.000000e+00> : vector<2x16x64xf32>
    %101 = tpu.matmul %56, %100, %cst_35 {dimension_numbers = #tpu.dot_dimension_numbers<[2], [1], [1], [2], [0, 0, 0, 1, 1, 2], [0], [0]>} : vector<2x16x16xf32>, vector<2x16x64xf32>, vector<2x16x64xf32> -> vector<2x16x64xf32>
    "tpu.trace_stop"() : () -> ()
    %102 = vector.shape_cast %101 : vector<2x16x64xf32> to vector<32x64xf32>
    %103 = vector.broadcast %6 : vector<1x64xf32> to vector<32x64xf32>
    %104 = arith.addf %102, %103 : vector<32x64xf32>
    %cst_36 = arith.constant 0.00999999977 : f32
    %105 = vector.broadcast %cst_36 : f32 to vector<32x64xf32>
    %106 = arith.mulf %105, %104 : vector<32x64xf32>
    %107 = arith.maximumf %104, %106 : vector<32x64xf32>
    %108 = arith.addf %107, %60 : vector<32x64xf32>
    %cst_37 = arith.constant dense<0.000000e+00> : vector<32xf32>
    %109 = vector.multi_reduction <add>, %108, %cst_37 [1] : vector<32x64xf32> to vector<32xf32>
    %110 = vector.shape_cast %109 : vector<32xf32> to vector<32x1xf32>
    %cst_38 = arith.constant 6.400000e+01 : f32
    %111 = vector.broadcast %cst_38 : f32 to vector<32x1xf32>
    %112 = arith.divf %110, %111 : vector<32x1xf32>
    %113 = vector.broadcast %112 : vector<32x1xf32> to vector<32x64xf32>
    %114 = arith.subf %108, %113 : vector<32x64xf32>
    %115 = arith.mulf %114, %114 : vector<32x64xf32>
    %cst_39 = arith.constant dense<0.000000e+00> : vector<32xf32>
    %116 = vector.multi_reduction <add>, %115, %cst_39 [1] : vector<32x64xf32> to vector<32xf32>
    %117 = vector.shape_cast %116 : vector<32xf32> to vector<32x1xf32>
    %cst_40 = arith.constant 6.400000e+01 : f32
    %118 = vector.broadcast %cst_40 : f32 to vector<32x1xf32>
    %119 = arith.divf %117, %118 : vector<32x1xf32>
    %cst_41 = arith.constant 9.99999974E-6 : f32
    %120 = vector.broadcast %cst_41 : f32 to vector<32x1xf32>
    %121 = arith.addf %119, %120 : vector<32x1xf32>
    %122 = math.rsqrt %121 : vector<32x1xf32>
    %123 = vector.broadcast %122 : vector<32x1xf32> to vector<32x64xf32>
    %124 = arith.mulf %114, %123 : vector<32x64xf32>
    %125 = vector.broadcast %8 : vector<1x64xf32> to vector<32x64xf32>
    %126 = arith.mulf %124, %125 : vector<32x64xf32>
    %127 = vector.broadcast %9 : vector<1x64xf32> to vector<32x64xf32>
    %128 = arith.addf %126, %127 : vector<32x64xf32>
    %129 = vector.shape_cast %128 : vector<32x64xf32> to vector<2x16x64xf32>
    %cst_42 = arith.constant dense<0xFF800000> : vector<2x64xf32>
    %130 = vector.multi_reduction <maximumf>, %129, %cst_42 [1] : vector<2x16x64xf32> to vector<2x64xf32>
    %cst_43 = arith.constant dense<0.000000e+00> : vector<2x128xf32>
    %131 = tpu.matmul %130, %17, %cst_43 {dimension_numbers = #tpu.dot_dimension_numbers<[1], [0], [0], [1], [0, 0, 1, 1], [], []>} : vector<2x64xf32>, vector<64x128xf32>, vector<2x128xf32> -> vector<2x128xf32>
    %132 = vector.broadcast %10 : vector<1x128xf32> to vector<2x128xf32>
    %133 = arith.addf %131, %132 : vector<2x128xf32>
    %c0_44 = arith.constant 0 : index
    %c0_45 = arith.constant 0 : index
    %c0_46 = arith.constant 0 : index
    %134 = vector.load %arg9[%c0_44, %c0_45, %c0_46] : memref<1x2x128xf32, #tpu.memory_space<vmem>>, vector<1x2x128xf32>
    %135 = vector.shape_cast %134 : vector<1x2x128xf32> to vector<2x128xf32>
    %136 = vector.shape_cast %133 : vector<2x128xf32> to vector<1x2x128xf32>
    tpu.vector_store %arg9[%c0_44, %c0_45, %c0_46], %136 {strides = array<i32>} : memref<1x2x128xf32, #tpu.memory_space<vmem>>, vector<1x2x128xf32>,
    return
  }
  func.func @transform_0(%arg0: i32) -> (i32, i32, i32) {
    %c0_i32 = arith.constant 0 : i32
    %c0_i32_0 = arith.constant 0 : i32
    %c0_i32_1 = arith.constant 0 : i32
    return %arg0, %c0_i32, %c0_i32_0 : i32, i32, i32
  }
  func.func @transform_1(%arg0: i32) -> (i32, i32, i32) {
    %c0_i32 = arith.constant 0 : i32
    %c0_i32_0 = arith.constant 0 : i32
    %c0_i32_1 = arith.constant 0 : i32
    return %arg0, %c0_i32, %c0_i32_0 : i32, i32, i32
  }
  func.func @transform_2(%arg0: i32) -> (i32, i32) {
    %c0_i32 = arith.constant 0 : i32
    %c0_i32_0 = arith.constant 0 : i32
    %c0_i32_1 = arith.constant 0 : i32
    return %c0_i32, %c0_i32_0 : i32, i32
  }
  func.func @transform_3(%arg0: i32) -> (i32, i32) {
    %c0_i32 = arith.constant 0 : i32
    %c0_i32_0 = arith.constant 0 : i32
    %c0_i32_1 = arith.constant 0 : i32
    return %c0_i32, %c0_i32_0 : i32, i32
  }
  func.func @transform_4(%arg0: i32) -> (i32, i32) {
    %c0_i32 = arith.constant 0 : i32
    %c0_i32_0 = arith.constant 0 : i32
    %c0_i32_1 = arith.constant 0 : i32
    return %c0_i32, %c0_i32_0 : i32, i32
  }
  func.func @transform_5(%arg0: i32) -> (i32, i32) {
    %c0_i32 = arith.constant 0 : i32
    %c0_i32_0 = arith.constant 0 : i32
    %c0_i32_1 = arith.constant 0 : i32
    return %c0_i32, %c0_i32_0 : i32, i32
  }
  func.func @transform_6(%arg0: i32) -> (i32, i32) {
    %c0_i32 = arith.constant 0 : i32
    %c0_i32_0 = arith.constant 0 : i32
    %c0_i32_1 = arith.constant 0 : i32
    return %c0_i32, %c0_i32_0 : i32, i32
  }
  func.func @transform_7(%arg0: i32) -> (i32, i32) {
    %c0_i32 = arith.constant 0 : i32
    %c0_i32_0 = arith.constant 0 : i32
    %c0_i32_1 = arith.constant 0 : i32
    return %c0_i32, %c0_i32_0 : i32, i32
  }
  func.func @transform_8(%arg0: i32) -> (i32, i32, i32) {
    %c0_i32 = arith.constant 0 : i32
    %c0_i32_0 = arith.constant 0 : i32
    %c0_i32_1 = arith.constant 0 : i32
    return %arg0, %c0_i32, %c0_i32_0 : i32, i32, i32
  }
}

</mosaic_0001>

<llo_original>
// kernel: tpu_custom_call.1
$region0: #{tpu_custom_call.1}
  #allocation0 [shape = 'u32[]', space=smem, size = 0x4, offset = 0x4, fixed_abs, tag = 'smem constant byte address 0x4 - core index']
  #allocation1 [shape = 'u32[72,128]{1,0:T(1,128)}', space=vmem, size = 0x9000, scoped, tag = 'internal scratch']
  %s0 = inlined_call_operand.vmem [shape: f32[4,16,8], index: 0, kind: input, shape index: {}]
  %s1 = inlined_call_operand.vmem [shape: s32[4,2,32], index: 1, kind: input, shape index: {}]
  %s2 = inlined_call_operand.vmem [shape: f32[8,192], index: 2, kind: input, shape index: {}]
  %s3 = inlined_call_operand.vmem [shape: f32[128,256], index: 3, kind: input, shape index: {}]
  %s4 = inlined_call_operand.hbm [shape: f32[256,512], index: 4, kind: input, shape index: {}]
  %s5 = inlined_call_operand.vmem [shape: f32[256,64], index: 5, kind: input, shape index: {}]
  %s6 = inlined_call_operand.vmem [shape: f32[64,128], index: 6, kind: input, shape index: {}]
  %s7 = inlined_call_operand.vmem [shape: f32[8,512], index: 7, kind: input, shape index: {}]
  %s8 = inlined_call_operand.hbm [shape: f32[2,2,128], index: 8, kind: output, shape index: {}]
  %s9 = sld [smem:[#allocation0]]
  $region69: #{tpu_custom_call.1} parent=0
    _
  %s11 = ssub.s32 1, %s9
  %s12 = scalar_select 0, %s11, %s9
  $region1: #{tpu_custom_call.1} parent=0
    #allocation2 [shape = 'u8[524288]{0}', space=vmem, size = 0x80000, scoped, tag = 'input window, operand 4, single buffered']
    #allocation3 [shape = 's32[2]{0}', space=sflag, size = 0x8, scoped, tag = 'scoped memory for tpu_custom_call.1']
    #allocation4 [shape = 's32[2]{0}', space=sflag, size = 0x8, scoped, tag = 'scoped memory for tpu_custom_call.1']
    #allocation5 [shape = 'u8[2048]{0}', space=vmem, size = 0x800, scoped, tag = 'output window, operand 0']
    %13 = vsyncpa [#allocation3], 0
    %14 = vsyncpa [#allocation4], 0
    %s15 = scalar_lea.sflag [#allocation4], 1
    %16 = vsyncpa %s15, 0
    loop: start=0, step=1, limit=4
    $region2: #{tpu_custom_call.1} parent=1 // loop_pre_header
      _
    $region3: #{tpu_custom_call.1} parent=1 // loop_header
      %s18 = sphi 0, %s22
      %p19 = scmp.ge.s32.totalorder %s18, 4
      %s28 = sphi 0, %s30
      %s31 = sphi 0, %s28
      %s32 = sphi 0, %s31
      %s48 = sphi 0, %s32
      %s54 = sphi 0, %s56
      %s57 = sphi 0, %s54
      %s58 = sphi 0, %s57
      %s74 = sphi 0, %s58
      %s78 = sphi 0, %s78
      %s80 = sphi 0, %s78
      %s81 = sphi 0, %s80
      %s95 = sphi 0, %s81
      %s99 = sphi 0, %s99
      %s101 = sphi 0, %s99
      %s102 = sphi 0, %s101
      %s116 = sphi 0, %s102
      %s120 = sphi 0, %s120
      %s122 = sphi 0, %s120
      %s123 = sphi 0, %s122
      %s137 = sphi 0, %s123
      %s141 = sphi 0, %s141
      %s143 = sphi 0, %s141
      %s144 = sphi 0, %s143
      %s158 = sphi 0, %s144
      %s162 = sphi 0, %s162
      %s164 = sphi 0, %s162
      %s165 = sphi 0, %s164
      %s179 = sphi 0, %s165
      %s183 = sphi 0, %s183
      %s185 = sphi 0, %s183
      %s186 = sphi 0, %s185
      %s200 = sphi 0, %s186
      %s206 = sphi 0, %s208
      %s209 = sphi 0, %s206
      %s210 = sphi 0, %s209
      %s226 = sphi 0, %s210
    $region4: #{tpu_custom_call.1} parent=1 // loop_header_branch
      %21 = sbr.rel (%p19) target = $region8
    $region5: #{tpu_custom_call.1} parent=1 // loop_body
      %s23 = ssub.s32 %s18, 1
      %s24 = ssub.s32 %s18, 2
      %s25 = sadd.s32 %s18, 1
      %s26 = ssub.s32 %s18, %s25
      %p27 = scmp.eq.s32.totalorder %s26, 0
      %s29 = sadd.s32 %s28, 1
      %s30 = scalar_select %p27, %s28, %s29
      %p33 = pneg %p27
      %p34 = scmp.eq.s32.totalorder %s18, 1
      %p35 = por %p33, %p34
      %p36 = scmp.ne.s32.totalorder %s28, %s31
      %p37 = scmp.eq.s32.totalorder %s18, 0
      %p38 = por %p36, %p37
      %p39 = scmp.ne.s32.totalorder %s28, %s31
      %p40 = scmp.eq.s32.totalorder %s23, 1
      %p41 = por %p39, %p40
      %p42 = scmp.ne.s32.totalorder %s31, %s32
      %p43 = scmp.eq.s32.totalorder %s23, 0
      %p44 = por %p42, %p43
      %p45 = scmp.ne.s32.totalorder %s31, %s32
      %p46 = scmp.eq.s32.totalorder %s24, 1
      %p47 = por %p45, %p46
      %p49 = scmp.ne.s32.totalorder %s32, %s48
      %p50 = scmp.eq.s32.totalorder %s24, 0
      %p51 = por %p49, %p50
      %s52 = ssub.s32 %s18, %s25
      %p53 = scmp.eq.s32.totalorder %s52, 0
      %s55 = sadd.s32 %s54, 1
      %s56 = scalar_select %p53, %s54, %s55
      %p59 = pneg %p53
      %p60 = scmp.eq.s32.totalorder %s18, 1
      %p61 = por %p59, %p60
      %p62 = scmp.ne.s32.totalorder %s54, %s57
      %p63 = scmp.eq.s32.totalorder %s18, 0
      %p64 = por %p62, %p63
      %p65 = scmp.ne.s32.totalorder %s54, %s57
      %p66 = scmp.eq.s32.totalorder %s23, 1
      %p67 = por %p65, %p66
      %p68 = scmp.ne.s32.totalorder %s57, %s58
      %p69 = scmp.eq.s32.totalorder %s23, 0
      %p70 = por %p68, %p69
      %p71 = scmp.ne.s32.totalorder %s57, %s58
      %p72 = scmp.eq.s32.totalorder %s24, 1
      %p73 = por %p71, %p72
      %p75 = scmp.ne.s32.totalorder %s58, %s74
      %p76 = scmp.eq.s32.totalorder %s24, 0
      %p77 = por %p75, %p76
      %s79 = sadd.s32 %s78, 1
      %p82 = scmp.eq.s32.totalorder %s18, 1
      %p83 = scmp.ne.s32.totalorder %s78, %s80
      %p84 = scmp.eq.s32.totalorder %s18, 0
      %p85 = por %p83, %p84
      %p86 = scmp.ne.s32.totalorder %s78, %s80
      %p87 = scmp.eq.s32.totalorder %s23, 1
      %p88 = por %p86, %p87
      %p89 = scmp.ne.s32.totalorder %s80, %s81
      %p90 = scmp.eq.s32.totalorder %s23, 0
      %p91 = por %p89, %p90
      %p92 = scmp.ne.s32.totalorder %s80, %s81
      %p93 = scmp.eq.s32.totalorder %s24, 1
      %p94 = por %p92, %p93
      %p96 = scmp.ne.s32.totalorder %s81, %s95
      %p97 = scmp.eq.s32.totalorder %s24, 0
      %p98 = por %p96, %p97
      %s100 = sadd.s32 %s99, 1
      %p103 = scmp.eq.s32.totalorder %s18, 1
      %p104 = scmp.ne.s32.totalorder %s99, %s101
      %p105 = scmp.eq.s32.totalorder %s18, 0
      %p106 = por %p104, %p105
      %p107 = scmp.ne.s32.totalorder %s99, %s101
      %p108 = scmp.eq.s32.totalorder %s23, 1
      %p109 = por %p107, %p108
      %p110 = scmp.ne.s32.totalorder %s101, %s102
      %p111 = scmp.eq.s32.totalorder %s23, 0
      %p112 = por %p110, %p111
      %p113 = scmp.ne.s32.totalorder %s101, %s102
      %p114 = scmp.eq.s32.totalorder %s24, 1
      %p115 = por %p113, %p114
      %p117 = scmp.ne.s32.totalorder %s102, %s116
      %p118 = scmp.eq.s32.totalorder %s24, 0
      %p119 = por %p117, %p118
      %s121 = sadd.s32 %s120, 1
      %p124 = scmp.eq.s32.totalorder %s18, 1
      %p125 = scmp.ne.s32.totalorder %s120, %s122
      %p126 = scmp.eq.s32.totalorder %s18, 0
      %p127 = por %p125, %p126
      %p128 = scmp.ne.s32.totalorder %s120, %s122
      %p129 = scmp.eq.s32.totalorder %s23, 1
      %p130 = por %p128, %p129
      %p131 = scmp.ne.s32.totalorder %s122, %s123
      %p132 = scmp.eq.s32.totalorder %s23, 0
      %p133 = por %p131, %p132
      %p134 = scmp.ne.s32.totalorder %s122, %s123
      %p135 = scmp.eq.s32.totalorder %s24, 1
      %p136 = por %p134, %p135
      %p138 = scmp.ne.s32.totalorder %s123, %s137
      %p139 = scmp.eq.s32.totalorder %s24, 0
      %p140 = por %p138, %p139
      %s142 = sadd.s32 %s141, 1
      %p145 = scmp.eq.s32.totalorder %s18, 1
      %p146 = scmp.ne.s32.totalorder %s141, %s143
      %p147 = scmp.eq.s32.totalorder %s18, 0
      %p148 = por %p146, %p147
      %p149 = scmp.ne.s32.totalorder %s141, %s143
      %p150 = scmp.eq.s32.totalorder %s23, 1
      %p151 = por %p149, %p150
      %p152 = scmp.ne.s32.totalorder %s143, %s144
      %p153 = scmp.eq.s32.totalorder %s23, 0
      %p154 = por %p152, %p153
      %p155 = scmp.ne.s32.totalorder %s143, %s144
      %p156 = scmp.eq.s32.totalorder %s24, 1
      %p157 = por %p155, %p156
      %p159 = scmp.ne.s32.totalorder %s144, %s158
      %p160 = scmp.eq.s32.totalorder %s24, 0
      %p161 = por %p159, %p160
      %s163 = sadd.s32 %s162, 1
      %p166 = scmp.eq.s32.totalorder %s18, 1
      %p167 = scmp.ne.s32.totalorder %s162, %s164
      %p168 = scmp.eq.s32.totalorder %s18, 0
      %p169 = por %p167, %p168
      %p170 = scmp.ne.s32.totalorder %s162, %s164
      %p171 = scmp.eq.s32.totalorder %s23, 1
      %p172 = por %p170, %p171
      %p173 = scmp.ne.s32.totalorder %s164, %s165
      %p174 = scmp.eq.s32.totalorder %s23, 0
      %p175 = por %p173, %p174
      %p176 = scmp.ne.s32.totalorder %s164, %s165
      %p177 = scmp.eq.s32.totalorder %s24, 1
      %p178 = por %p176, %p177
      %p180 = scmp.ne.s32.totalorder %s165, %s179
      %p181 = scmp.eq.s32.totalorder %s24, 0
      %p182 = por %p180, %p181
      %s184 = sadd.s32 %s183, 1
      %p187 = scmp.eq.s32.totalorder %s18, 1
      %p188 = scmp.ne.s32.totalorder %s183, %s185
      %p189 = scmp.eq.s32.totalorder %s18, 0
      %p190 = por %p188, %p189
      %p191 = scmp.ne.s32.totalorder %s183, %s185
      %p192 = scmp.eq.s32.totalorder %s23, 1
      %p193 = por %p191, %p192
      %p194 = scmp.ne.s32.totalorder %s185, %s186
      %p195 = scmp.eq.s32.totalorder %s23, 0
      %p196 = por %p194, %p195
      %p197 = scmp.ne.s32.totalorder %s185, %s186
      %p198 = scmp.eq.s32.totalorder %s24, 1
      %p199 = por %p197, %p198
      %p201 = scmp.ne.s32.totalorder %s186, %s200
      %p202 = scmp.eq.s32.totalorder %s24, 0
      %p203 = por %p201, %p202
      %s204 = ssub.s32 %s18, %s25
      %p205 = scmp.eq.s32.totalorder %s204, 0
      %s207 = sadd.s32 %s206, 1
      %s208 = scalar_select %p205, %s206, %s207
      %p211 = pneg %p205
      %p212 = scmp.eq.s32.totalorder %s18, 1
      %p213 = por %p211, %p212
      %p214 = scmp.ne.s32.totalorder %s206, %s209
      %p215 = scmp.eq.s32.totalorder %s18, 0
      %p216 = por %p214, %p215
      %p217 = scmp.ne.s32.totalorder %s206, %s209
      %p218 = scmp.eq.s32.totalorder %s23, 1
      %p219 = por %p217, %p218
      %p220 = scmp.ne.s32.totalorder %s209, %s210
      %p221 = scmp.eq.s32.totalorder %s23, 0
      %p222 = por %p220, %p221
      %p223 = scmp.ne.s32.totalorder %s209, %s210
      %p224 = scmp.eq.s32.totalorder %s24, 1
      %p225 = por %p223, %p224
      %p227 = scmp.ne.s32.totalorder %s210, %s226
      %p228 = scmp.eq.s32.totalorder %s24, 0
      %p229 = por %p227, %p228
      %p230 = scmp.le.s32.totalorder 1, %s18
      %p231 = scmp.lt.s32.totalorder %s18, 3
      %p232 = pnand %p230, %p231
      %p233 = pneg %p232
      // Predicated region
      $region9: #{tpu_custom_call.1} parent=5 // pred_check
        _
      $region10: #{tpu_custom_call.1} parent=5 // pred_check_branch
        %235 = sbr.rel (%p232) target = $region12
      $region11: #{tpu_custom_call.1} parent=5 // pred_region
        %s236 = ssub.s32 %s18, 1
        // Predicated region
        $region13: #{tpu_custom_call.1} parent=11 // pred_check
          %p237 = pneg %p91
        $region14: #{tpu_custom_call.1} parent=11 // pred_check_branch
          %239 = sbr.rel (%p237) target = $region16
        $region15: #{tpu_custom_call.1} parent=11 // pred_region
          _
        $region16: #{tpu_custom_call.1} parent=11 // pred_fallthru
          _
        // Predicated region
        $region17: #{tpu_custom_call.1} parent=11 // pred_check
          %p240 = pneg %p112
        $region18: #{tpu_custom_call.1} parent=11 // pred_check_branch
          %242 = sbr.rel (%p240) target = $region20
        $region19: #{tpu_custom_call.1} parent=11 // pred_region
          _
        $region20: #{tpu_custom_call.1} parent=11 // pred_fallthru
          _
        // Predicated region
        $region21: #{tpu_custom_call.1} parent=11 // pred_check
          %p243 = pneg %p133
        $region22: #{tpu_custom_call.1} parent=11 // pred_check_branch
          %245 = sbr.rel (%p243) target = $region24
        $region23: #{tpu_custom_call.1} parent=11 // pred_region
          %247 = vsyncadd [#allocation3], 0
          %s248 = sshll.u32 %s4, 4
          %s249 = int_to_ptr.hbm [resolvable:$true] %s248
          %s250 = sshll.u32 [#allocation2], 4
          %s251 = int_to_ptr.vmem [resolvable:$true] %s250
          %256 = dma.hbm_to_vmem [thread:$0]  %s249, 16384, %s251, [#allocation3], 512, 512, 32
        $region24: #{tpu_custom_call.1} parent=11 // pred_fallthru
          _
        // Predicated region
        $region25: #{tpu_custom_call.1} parent=11 // pred_check
          %p257 = pneg %p154
        $region26: #{tpu_custom_call.1} parent=11 // pred_check_branch
          %259 = sbr.rel (%p257) target = $region28
        $region27: #{tpu_custom_call.1} parent=11 // pred_region
          _
        $region28: #{tpu_custom_call.1} parent=11 // pred_fallthru
          _
        // Predicated region
        $region29: #{tpu_custom_call.1} parent=11 // pred_check
          %p260 = pneg %p175
        $region30: #{tpu_custom_call.1} parent=11 // pred_check_branch
          %262 = sbr.rel (%p260) target = $region32
        $region31: #{tpu_custom_call.1} parent=11 // pred_region
          _
        $region32: #{tpu_custom_call.1} parent=11 // pred_fallthru
          _
        // Predicated region
        $region33: #{tpu_custom_call.1} parent=11 // pred_check
          %p263 = pneg %p196
        $region34: #{tpu_custom_call.1} parent=11 // pred_check_branch
          %265 = sbr.rel (%p263) target = $region36
        $region35: #{tpu_custom_call.1} parent=11 // pred_region
          _
        $region36: #{tpu_custom_call.1} parent=11 // pred_fallthru
          _
      $region12: #{tpu_custom_call.1} parent=5 // pred_fallthru
        _
      %p266 = scmp.lt.s32.totalorder %s18, 2
      // Predicated region
      $region37: #{tpu_custom_call.1} parent=5 // pred_check
        %p267 = pneg %p266
      $region38: #{tpu_custom_call.1} parent=5 // pred_check_branch
        %269 = sbr.rel (%p267) target = $region40
      $region39: #{tpu_custom_call.1} parent=5 // pred_region
        // Predicated region
        $region41: #{tpu_custom_call.1} parent=39 // pred_check
          %p270 = pneg %p38
        $region42: #{tpu_custom_call.1} parent=39 // pred_check_branch
          %272 = sbr.rel (%p270) target = $region44
        $region43: #{tpu_custom_call.1} parent=39 // pred_region
          %s273 = smul.u32 2, %s18
          %p274 = scmp.lt.s32.totalorder %s273, 3
          %s275 = scalar_select %p274, %s273, 3
          %s276 = smul.addr %s275, 2
          %s277 = smul.addr %s276, 8
          %s278 = scalar_lea.vmem %s0, %s277
          %s279 = smul.u32 2, %s18
        $region44: #{tpu_custom_call.1} parent=39 // pred_fallthru
          _
        // Predicated region
        $region45: #{tpu_custom_call.1} parent=39 // pred_check
          %p280 = pneg %p64
        $region46: #{tpu_custom_call.1} parent=39 // pred_check_branch
          %282 = sbr.rel (%p280) target = $region48
        $region47: #{tpu_custom_call.1} parent=39 // pred_region
          %s283 = smul.u32 2, %s18
          %p284 = scmp.lt.s32.totalorder %s283, 3
          %s285 = scalar_select %p284, %s283, 3
          %s286 = smul.addr %s285, 2
          %s287 = scalar_lea.vmem %s1, %s286
          %s288 = smul.u32 2, %s18
        $region48: #{tpu_custom_call.1} parent=39 // pred_fallthru
          _
      $region40: #{tpu_custom_call.1} parent=5 // pred_fallthru
        _
      %p289 = scmp.le.s32.totalorder 1, %s18
      %p290 = scmp.lt.s32.totalorder %s18, 3
      %p291 = pnand %p289, %p290
      %p292 = pneg %p291
      // Predicated region
      $region49: #{tpu_custom_call.1} parent=5 // pred_check
        _
      $region50: #{tpu_custom_call.1} parent=5 // pred_check_branch
        %294 = sbr.rel (%p291) target = $region52
      $region51: #{tpu_custom_call.1} parent=5 // pred_region
        %s295 = ssub.s32 %s18, 1
        // Predicated region
        $region53: #{tpu_custom_call.1} parent=51 // pred_check
          %p296 = pneg %p133
        $region54: #{tpu_custom_call.1} parent=51 // pred_check_branch
          %298 = sbr.rel (%p296) target = $region56
        $region55: #{tpu_custom_call.1} parent=51 // pred_region
          %300 = dma.done [#allocation3], 16384
        $region56: #{tpu_custom_call.1} parent=51 // pred_fallthru
          _
        %s301 = smul.u32 2, %s23
        %p302 = scmp.lt.s32.totalorder %s301, 3
        %s303 = scalar_select %p302, %s301, 3
        %s304 = smul.addr %s303, 2
        %s305 = smul.addr %s304, 8
        %s306 = scalar_lea.vmem %s0, %s305
        %p307 = pneg %p44
        %p308 = pneg %p41
        %s309 = smul.u32 2, %s23
        %p310 = scmp.lt.s32.totalorder %s309, 3
        %s311 = scalar_select %p310, %s309, 3
        %s312 = smul.addr %s311, 2
        %s313 = scalar_lea.vmem %s1, %s312
        %p314 = pneg %p70
        %p315 = pneg %p67
        %p316 = pneg %p91
        %p317 = pneg %p88
        %p318 = pneg %p112
        %p319 = pneg %p109
        %p320 = pneg %p133
        %p321 = pneg %p130
        %p322 = pneg %p154
        %p323 = pneg %p151
        %p324 = pneg %p175
        %p325 = pneg %p172
        %p326 = pneg %p196
        %p327 = pneg %p193
        %p328 = pneg %p222
        %p329 = pneg %p219
        %s330 = sand.u32 %s209, 1
        %s331 = scalar_lea.sflag [#allocation4], %s330
        %s332 = sand.u32 %s209, 1
        %s333 = smul.addr %s332, 2
        %s334 = scalar_lea.vmem [#allocation5], %s333
        %s335 = smul.u32 2, %s23
        %p336 = scmp.lt.s32.totalorder %s335, 3
        %s337 = scalar_select %p336, %s335, 3
        %s338 = smul.addr %s337, 2
        %s339 = smul.addr %s338, 8
        %s340 = scalar_lea.vmem %s0, %s339
        %s341 = smul.u32 2, %s23
        %s342 = smul.u32 2, %s23
        %p343 = scmp.lt.s32.totalorder %s342, 3
        %s344 = scalar_select %p343, %s342, 3
        %s345 = smul.addr %s344, 2
        %s346 = scalar_lea.vmem %s1, %s345
        %s347 = smul.u32 2, %s23
        %v349 = vld [vmem:[%s340] sm:$0xff]
        %v350 = vld [vmem:[%s340 + $0x8] sm:$0xff]
        %v351 = vld [vmem:[%s340 + $0x10] sm:$0xff]
        %v352 = vld [vmem:[%s340 + $0x18] sm:$0xff]
        %v353 = vld [vmem:[%s346] sm:$0x3]
        %v354 = vld [vmem:[%s346 + $0x2] sm:$0x3]
        %v355 = vld [vmem:[%s7] sm:$0xff]
        %v356 = vld [vmem:[%s7 + $0x8] sm:$0xff]
        %v357 = vld [vmem:[%s7 + $0x10] sm:$0xff]
        %v358 = vld [vmem:[%s7 + $0x18] sm:$0xff]
        %v359 = vld [vmem:[%s2] sm:$0xff]
        %v360 = vld [vmem:[%s2 + $0x8] sm:$0xff]
        %v361 = vld [vmem:[%s3] sm:$0xff]
        %v362 = vld [vmem:[%s3 + $0x8] sm:$0xff]
        %v363 = vld [vmem:[%s3 + $0x10] sm:$0xff]
        %v364 = vld [vmem:[%s3 + $0x18] sm:$0xff]
        %v365 = vld [vmem:[%s3 + $0x20] sm:$0xff]
        %v366 = vld [vmem:[%s3 + $0x28] sm:$0xff]
        %v367 = vld [vmem:[%s3 + $0x30] sm:$0xff]
        %v368 = vld [vmem:[%s3 + $0x38] sm:$0xff]
        %v369 = vld [vmem:[%s3 + $0x40] sm:$0xff]
        %v370 = vld [vmem:[%s3 + $0x48] sm:$0xff]
        %v371 = vld [vmem:[%s3 + $0x50] sm:$0xff]
        %v372 = vld [vmem:[%s3 + $0x58] sm:$0xff]
        %v373 = vld [vmem:[%s3 + $0x60] sm:$0xff]
        %v374 = vld [vmem:[%s3 + $0x68] sm:$0xff]
        %v375 = vld [vmem:[%s3 + $0x70] sm:$0xff]
        %v376 = vld [vmem:[%s3 + $0x78] sm:$0xff]
        %v377 = vld [vmem:[%s3 + $0x80] sm:$0xff]
        %v378 = vld [vmem:[%s3 + $0x88] sm:$0xff]
        %v379 = vld [vmem:[%s3 + $0x90] sm:$0xff]
        %v380 = vld [vmem:[%s3 + $0x98] sm:$0xff]
        %v381 = vld [vmem:[%s3 + $0xa0] sm:$0xff]
        %v382 = vld [vmem:[%s3 + $0xa8] sm:$0xff]
        %v383 = vld [vmem:[%s3 + $0xb0] sm:$0xff]
        %v384 = vld [vmem:[%s3 + $0xb8] sm:$0xff]
        %v385 = vld [vmem:[%s3 + $0xc0] sm:$0xff]
        %v386 = vld [vmem:[%s3 + $0xc8] sm:$0xff]
        %v387 = vld [vmem:[%s3 + $0xd0] sm:$0xff]
        %v388 = vld [vmem:[%s3 + $0xd8] sm:$0xff]
        %v389 = vld [vmem:[%s3 + $0xe0] sm:$0xff]
        %v390 = vld [vmem:[%s3 + $0xe8] sm:$0xff]
        %v391 = vld [vmem:[%s3 + $0xf0] sm:$0xff]
        %v392 = vld [vmem:[%s3 + $0xf8] sm:$0xff]
        %v393 = vld [vmem:[#allocation2] sm:$0xff]
        %v394 = vld [vmem:[#allocation2 + $0x8] sm:$0xff]
        %v395 = vld [vmem:[#allocation2 + $0x10] sm:$0xff]
        %v396 = vld [vmem:[#allocation2 + $0x18] sm:$0xff]
        %v397 = vld [vmem:[#allocation2 + $0x20] sm:$0xff]
        %v398 = vld [vmem:[#allocation2 + $0x28] sm:$0xff]
        %v399 = vld [vmem:[#allocation2 + $0x30] sm:$0xff]
        %v400 = vld [vmem:[#allocation2 + $0x38] sm:$0xff]
        %v401 = vld [vmem:[#allocation2 + $0x40] sm:$0xff]
        %v402 = vld [vmem:[#allocation2 + $0x48] sm:$0xff]
        %v403 = vld [vmem:[#allocation2 + $0x50] sm:$0xff]
        %v404 = vld [vmem:[#allocation2 + $0x58] sm:$0xff]
        %v405 = vld [vmem:[#allocation2 + $0x60] sm:$0xff]
        %v406 = vld [vmem:[#allocation2 + $0x68] sm:$0xff]
        %v407 = vld [vmem:[#allocation2 + $0x70] sm:$0xff]
        %v408 = vld [vmem:[#allocation2 + $0x78] sm:$0xff]
        %v409 = vld [vmem:[#allocation2 + $0x80] sm:$0xff]
        %v410 = vld [vmem:[#allocation2 + $0x88] sm:$0xff]
        %v411 = vld [vmem:[#allocation2 + $0x90] sm:$0xff]
        %v412 = vld [vmem:[#allocation2 + $0x98] sm:$0xff]
        %v413 = vld [vmem:[#allocation2 + $0xa0] sm:$0xff]
        %v414 = vld [vmem:[#allocation2 + $0xa8] sm:$0xff]
        %v415 = vld [vmem:[#allocation2 + $0xb0] sm:$0xff]
        %v416 = vld [vmem:[#allocation2 + $0xb8] sm:$0xff]
        %v417 = vld [vmem:[#allocation2 + $0xc0] sm:$0xff]
        %v418 = vld [vmem:[#allocation2 + $0xc8] sm:$0xff]
        %v419 = vld [vmem:[#allocation2 + $0xd0] sm:$0xff]
        %v420 = vld [vmem:[#allocation2 + $0xd8] sm:$0xff]
        %v421 = vld [vmem:[#allocation2 + $0xe0] sm:$0xff]
        %v422 = vld [vmem:[#allocation2 + $0xe8] sm:$0xff]
        %v423 = vld [vmem:[#allocation2 + $0xf0] sm:$0xff]
        %v424 = vld [vmem:[#allocation2 + $0xf8] sm:$0xff]
        %v425 = vld [vmem:[#allocation2 + $0x100] sm:$0xff]
        %v426 = vld [vmem:[#allocation2 + $0x108] sm:$0xff]
        %v427 = vld [vmem:[#allocation2 + $0x110] sm:$0xff]
        %v428 = vld [vmem:[#allocation2 + $0x118] sm:$0xff]
        %v429 = vld [vmem:[#allocation2 + $0x120] sm:$0xff]
        %v430 = vld [vmem:[#allocation2 + $0x128] sm:$0xff]
        %v431 = vld [vmem:[#allocation2 + $0x130] sm:$0xff]
        %v432 = vld [vmem:[#allocation2 + $0x138] sm:$0xff]
        %v433 = vld [vmem:[#allocation2 + $0x140] sm:$0xff]
        %v434 = vld [vmem:[#allocation2 + $0x148] sm:$0xff]
        %v435 = vld [vmem:[#allocation2 + $0x150] sm:$0xff]
        %v436 = vld [vmem:[#allocation2 + $0x158] sm:$0xff]
        %v437 = vld [vmem:[#allocation2 + $0x160] sm:$0xff]
        %v438 = vld [vmem:[#allocation2 + $0x168] sm:$0xff]
        %v439 = vld [vmem:[#allocation2 + $0x170] sm:$0xff]
        %v440 = vld [vmem:[#allocation2 + $0x178] sm:$0xff]
        %v441 = vld [vmem:[#allocation2 + $0x180] sm:$0xff]
        %v442 = vld [vmem:[#allocation2 + $0x188] sm:$0xff]
        %v443 = vld [vmem:[#allocation2 + $0x190] sm:$0xff]
        %v444 = vld [vmem:[#allocation2 + $0x198] sm:$0xff]
        %v445 = vld [vmem:[#allocation2 + $0x1a0] sm:$0xff]
        %v446 = vld [vmem:[#allocation2 + $0x1a8] sm:$0xff]
        %v447 = vld [vmem:[#allocation2 + $0x1b0] sm:$0xff]
        %v448 = vld [vmem:[#allocation2 + $0x1b8] sm:$0xff]
        %v449 = vld [vmem:[#allocation2 + $0x1c0] sm:$0xff]
        %v450 = vld [vmem:[#allocation2 + $0x1c8] sm:$0xff]
        %v451 = vld [vmem:[#allocation2 + $0x1d0] sm:$0xff]
        %v452 = vld [vmem:[#allocation2 + $0x1d8] sm:$0xff]
        %v453 = vld [vmem:[#allocation2 + $0x1e0] sm:$0xff]
        %v454 = vld [vmem:[#allocation2 + $0x1e8] sm:$0xff]
        %v455 = vld [vmem:[#allocation2 + $0x1f0] sm:$0xff]
        %v456 = vld [vmem:[#allocation2 + $0x1f8] sm:$0xff]
        %v457 = vld [vmem:[#allocation2 + $0x200] sm:$0xff]
        %v458 = vld [vmem:[#allocation2 + $0x208] sm:$0xff]
        %v459 = vld [vmem:[#allocation2 + $0x210] sm:$0xff]
        %v460 = vld [vmem:[#allocation2 + $0x218] sm:$0xff]
        %v461 = vld [vmem:[#allocation2 + $0x220] sm:$0xff]
        %v462 = vld [vmem:[#allocation2 + $0x228] sm:$0xff]
        %v463 = vld [vmem:[#allocation2 + $0x230] sm:$0xff]
        %v464 = vld [vmem:[#allocation2 + $0x238] sm:$0xff]
        %v465 = vld [vmem:[#allocation2 + $0x240] sm:$0xff]
        %v466 = vld [vmem:[#allocation2 + $0x248] sm:$0xff]
        %v467 = vld [vmem:[#allocation2 + $0x250] sm:$0xff]
        %v468 = vld [vmem:[#allocation2 + $0x258] sm:$0xff]
        %v469 = vld [vmem:[#allocation2 + $0x260] sm:$0xff]
        %v470 = vld [vmem:[#allocation2 + $0x268] sm:$0xff]
        %v471 = vld [vmem:[#allocation2 + $0x270] sm:$0xff]
        %v472 = vld [vmem:[#allocation2 + $0x278] sm:$0xff]
        %v473 = vld [vmem:[#allocation2 + $0x280] sm:$0xff]
        %v474 = vld [vmem:[#allocation2 + $0x288] sm:$0xff]
        %v475 = vld [vmem:[#allocation2 + $0x290] sm:$0xff]
        %v476 = vld [vmem:[#allocation2 + $0x298] sm:$0xff]
        %v477 = vld [vmem:[#allocation2 + $0x2a0] sm:$0xff]
        %v478 = vld [vmem:[#allocation2 + $0x2a8] sm:$0xff]
        %v479 = vld [vmem:[#allocation2 + $0x2b0] sm:$0xff]
        %v480 = vld [vmem:[#allocation2 + $0x2b8] sm:$0xff]
        %v481 = vld [vmem:[#allocation2 + $0x2c0] sm:$0xff]
        %v482 = vld [vmem:[#allocation2 + $0x2c8] sm:$0xff]
        %v483 = vld [vmem:[#allocation2 + $0x2d0] sm:$0xff]
        %v484 = vld [vmem:[#allocation2 + $0x2d8] sm:$0xff]
        %v485 = vld [vmem:[#allocation2 + $0x2e0] sm:$0xff]
        %v486 = vld [vmem:[#allocation2 + $0x2e8] sm:$0xff]
        %v487 = vld [vmem:[#allocation2 + $0x2f0] sm:$0xff]
        %v488 = vld [vmem:[#allocation2 + $0x2f8] sm:$0xff]
        %v489 = vld [vmem:[#allocation2 + $0x300] sm:$0xff]
        %v490 = vld [vmem:[#allocation2 + $0x308] sm:$0xff]
        %v491 = vld [vmem:[#allocation2 + $0x310] sm:$0xff]
        %v492 = vld [vmem:[#allocation2 + $0x318] sm:$0xff]
        %v493 = vld [vmem:[#allocation2 + $0x320] sm:$0xff]
        %v494 = vld [vmem:[#allocation2 + $0x328] sm:$0xff]
        %v495 = vld [vmem:[#allocation2 + $0x330] sm:$0xff]
        %v496 = vld [vmem:[#allocation2 + $0x338] sm:$0xff]
        %v497 = vld [vmem:[#allocation2 + $0x340] sm:$0xff]
        %v498 = vld [vmem:[#allocation2 + $0x348] sm:$0xff]
        %v499 = vld [vmem:[#allocation2 + $0x350] sm:$0xff]
        %v500 = vld [vmem:[#allocation2 + $0x358] sm:$0xff]
        %v501 = vld [vmem:[#allocation2 + $0x360] sm:$0xff]
        %v502 = vld [vmem:[#allocation2 + $0x368] sm:$0xff]
        %v503 = vld [vmem:[#allocation2 + $0x370] sm:$0xff]
        %v504 = vld [vmem:[#allocation2 + $0x378] sm:$0xff]
        %v505 = vld [vmem:[#allocation2 + $0x380] sm:$0xff]
        %v506 = vld [vmem:[#allocation2 + $0x388] sm:$0xff]
        %v507 = vld [vmem:[#allocation2 + $0x390] sm:$0xff]
        %v508 = vld [vmem:[#allocation2 + $0x398] sm:$0xff]
        %v509 = vld [vmem:[#allocation2 + $0x3a0] sm:$0xff]
        %v510 = vld [vmem:[#allocation2 + $0x3a8] sm:$0xff]
        %v511 = vld [vmem:[#allocation2 + $0x3b0] sm:$0xff]
        %v512 = vld [vmem:[#allocation2 + $0x3b8] sm:$0xff]
        %v513 = vld [vmem:[#allocation2 + $0x3c0] sm:$0xff]
        %v514 = vld [vmem:[#allocation2 + $0x3c8] sm:$0xff]
        %v515 = vld [vmem:[#allocation2 + $0x3d0] sm:$0xff]
        %v516 = vld [vmem:[#allocation2 + $0x3d8] sm:$0xff]
        %v517 = vld [vmem:[#allocation2 + $0x3e0] sm:$0xff]
        %v518 = vld [vmem:[#allocation2 + $0x3e8] sm:$0xff]
        %v519 = vld [vmem:[#allocation2 + $0x3f0] sm:$0xff]
        %v520 = vld [vmem:[#allocation2 + $0x3f8] sm:$0xff]
        %v521 = vld [vmem:[%s5] sm:$0xff]
        %v522 = vld [vmem:[%s5 + $0x8] sm:$0xff]
        %v523 = vld [vmem:[%s5 + $0x10] sm:$0xff]
        %v524 = vld [vmem:[%s5 + $0x18] sm:$0xff]
        %v525 = vld [vmem:[%s5 + $0x20] sm:$0xff]
        %v526 = vld [vmem:[%s5 + $0x28] sm:$0xff]
        %v527 = vld [vmem:[%s5 + $0x30] sm:$0xff]
        %v528 = vld [vmem:[%s5 + $0x38] sm:$0xff]
        %v529 = vld [vmem:[%s5 + $0x40] sm:$0xff]
        %v530 = vld [vmem:[%s5 + $0x48] sm:$0xff]
        %v531 = vld [vmem:[%s5 + $0x50] sm:$0xff]
        %v532 = vld [vmem:[%s5 + $0x58] sm:$0xff]
        %v533 = vld [vmem:[%s5 + $0x60] sm:$0xff]
        %v534 = vld [vmem:[%s5 + $0x68] sm:$0xff]
        %v535 = vld [vmem:[%s5 + $0x70] sm:$0xff]
        %v536 = vld [vmem:[%s5 + $0x78] sm:$0xff]
        %v537 = vld [vmem:[%s5 + $0x80] sm:$0xff]
        %v538 = vld [vmem:[%s5 + $0x88] sm:$0xff]
        %v539 = vld [vmem:[%s5 + $0x90] sm:$0xff]
        %v540 = vld [vmem:[%s5 + $0x98] sm:$0xff]
        %v541 = vld [vmem:[%s5 + $0xa0] sm:$0xff]
        %v542 = vld [vmem:[%s5 + $0xa8] sm:$0xff]
        %v543 = vld [vmem:[%s5 + $0xb0] sm:$0xff]
        %v544 = vld [vmem:[%s5 + $0xb8] sm:$0xff]
        %v545 = vld [vmem:[%s5 + $0xc0] sm:$0xff]
        %v546 = vld [vmem:[%s5 + $0xc8] sm:$0xff]
        %v547 = vld [vmem:[%s5 + $0xd0] sm:$0xff]
        %v548 = vld [vmem:[%s5 + $0xd8] sm:$0xff]
        %v549 = vld [vmem:[%s5 + $0xe0] sm:$0xff]
        %v550 = vld [vmem:[%s5 + $0xe8] sm:$0xff]
        %v551 = vld [vmem:[%s5 + $0xf0] sm:$0xff]
        %v552 = vld [vmem:[%s5 + $0xf8] sm:$0xff]
        %v553 = vld [vmem:[%s6] sm:$0xff]
        %v554 = vld [vmem:[%s6 + $0x8] sm:$0xff]
        %v555 = vld [vmem:[%s6 + $0x10] sm:$0xff]
        %v556 = vld [vmem:[%s6 + $0x18] sm:$0xff]
        %v557 = vld [vmem:[%s6 + $0x20] sm:$0xff]
        %v558 = vld [vmem:[%s6 + $0x28] sm:$0xff]
        %v559 = vld [vmem:[%s6 + $0x30] sm:$0xff]
        %v560 = vld [vmem:[%s6 + $0x38] sm:$0xff]
        %v561 = vlaneseq
        %v562 = vshrl.u32 %v561, 7
        %v563 = vadd.s32 %v562, 8
        %v564 = vperm.slane %v353, 0
        %v565 = vperm.slane %v354, 0
        %vm566 = vcmp.eq.s32.totalorder %v564, %v562
        %vm567 = vcmp.eq.s32.totalorder %v564, %v563
        %vm568 = vcmp.eq.s32.totalorder %v565, %v562
        %vm569 = vcmp.eq.s32.totalorder %v565, %v563
        %v570 = vsel %vm566, 1, 0
        %v571 = vsel %vm567, 1, 0
        %v572 = vsel %vm568, 1, 0
        %v573 = vsel %vm569, 1, 0
        %v574 = vcvt.s32.f32 %v570
        %v575 = vcvt.s32.f32 %v571
        %v576 = vcvt.s32.f32 %v572
        %v577 = vcvt.s32.f32 %v573
        %v578 = vpack.c.bf16 %v574, %v574
        %v579 = vpack.c.bf16 %v575, %v575
        %v580 = vpack.c.bf16 %v576, %v576
        %v581 = vpack.c.bf16 %v577, %v577
        %v582 = vperm.slane %v353, 1
        %v583 = vperm.slane %v354, 1
        %vm584 = vcmp.eq.s32.totalorder %v582, %v562
        %vm585 = vcmp.eq.s32.totalorder %v582, %v563
        %vm586 = vcmp.eq.s32.totalorder %v583, %v562
        %vm587 = vcmp.eq.s32.totalorder %v583, %v563
        %v588 = vsel %vm584, 1, 0
        %v589 = vsel %vm585, 1, 0
        %v590 = vsel %vm586, 1, 0
        %v591 = vsel %vm587, 1, 0
        %v592 = vcvt.s32.f32 %v588
        %v593 = vcvt.s32.f32 %v589
        %v594 = vcvt.s32.f32 %v590
        %v595 = vcvt.s32.f32 %v591
        %v596 = vpack.c.bf16 %v592, %v592
        %v597 = vpack.c.bf16 %v593, %v593
        %v598 = vpack.c.bf16 %v594, %v594
        %v599 = vpack.c.bf16 %v595, %v595
        %v602 = vunpack.c.l.b16 %v578
        %v603 = vunpack.c.l.b16 %v579
        %v604 = vpack.c.b16 %v603, %v602
        %v607 = vunpack.c.l.b16 %v596
        %v608 = vunpack.c.l.b16 %v597
        %v609 = vpack.c.b16 %v608, %v607
        %vm610 = vcmask 261120
        %v612 = vsel %vm610, %v604, 0
        %v615 = vsel %vm610, %v609, 0
        %617 = vmatpush.bf16.xpose.msra.mxu0 0
        %618 = vmatpush.bf16.xpose.msra.mxu0 0
        %619 = vmatpush.bf16.xpose.msra.mxu0 0
        %620 = vmatpush.bf16.xpose.msra.mxu0 0
        %621 = vmatpush.bf16.xpose.msra.mxu0 0
        %622 = vmatpush.bf16.xpose.msra.mxu0 0
        %623 = vmatpush.bf16.xpose.msra.mxu0 0
        %624 = vmatpush.bf16.xpose.msra.mxu0 %v615
        %625 = vmatmul.bf16.gmra.mxu0 %v612
        %v626 = vpop.f32.mrf.mxu0
        %v627 = vadd.f32 0.0, %v626
        %v628 = vpop.f32.mrf.mxu0
        %v629 = vadd.f32 0.0, %v628
        %630 = vdwg.mxu0
        %v633 = vunpack.c.l.b16 %v580
        %v634 = vunpack.c.l.b16 %v581
        %v635 = vpack.c.b16 %v634, %v633
        %v638 = vunpack.c.l.b16 %v598
        %v639 = vunpack.c.l.b16 %v599
        %v640 = vpack.c.b16 %v639, %v638
        %v642 = vsel %vm610, %v635, 0
        %v645 = vsel %vm610, %v640, 0
        %647 = vmatpush.bf16.xpose.msra.mxu0 0
        %648 = vmatpush.bf16.xpose.msra.mxu0 0
        %649 = vmatpush.bf16.xpose.msra.mxu0 0
        %650 = vmatpush.bf16.xpose.msra.mxu0 0
        %651 = vmatpush.bf16.xpose.msra.mxu0 0
        %652 = vmatpush.bf16.xpose.msra.mxu0 0
        %653 = vmatpush.bf16.xpose.msra.mxu0 0
        %654 = vmatpush.bf16.xpose.msra.mxu0 %v645
        %655 = vmatmul.bf16.gmra.mxu0 %v642
        %v656 = vpop.f32.mrf.mxu0
        %v657 = vadd.f32 0.0, %v656
        %v658 = vpop.f32.mrf.mxu0
        %v659 = vadd.f32 0.0, %v658
        %660 = vdwg.mxu0
        %vm661 = vcmp.gt.f32.partialorder %v627, 0.0
        %vm662 = vcmp.gt.f32.partialorder %v629, 0.0
        %vm663 = vcmp.gt.f32.partialorder %v657, 0.0
        %vm664 = vcmp.gt.f32.partialorder %v659, 0.0
        %v665 = vsel %vm661, 1, 0
        %v666 = vsel %vm662, 1, 0
        %v667 = vsel %vm663, 1, 0
        %v668 = vsel %vm664, 1, 0
        %v669 = vcvt.s32.f32 %v665
        %v670 = vcvt.s32.f32 %v666
        %v671 = vcvt.s32.f32 %v667
        %v672 = vcvt.s32.f32 %v668
        %v673 = vlaneseq
        %v674 = vand.u32 %v673, 127
        %vm675 = vcmp.eq.s32.totalorder %v562, %v674
        %vm676 = vcmp.eq.s32.totalorder %v563, %v674
        %v677 = vsel %vm675, 1, 0
        %v678 = vsel %vm676, 1, 0
        %v679 = vcvt.s32.f32 %v677
        %v680 = vcvt.s32.f32 %v678
        %681 = vmatpush.bf16.xpose.msra.mxu0 0
        %682 = vmatpush.bf16.xpose.msra.mxu0 0
        %683 = vmatpush.bf16.xpose.msra.mxu0 0
        %684 = vmatpush.bf16.xpose.msra.mxu0 0
        %685 = vmatpush.bf16.xpose.msra.mxu0 0
        %686 = vmatpush.bf16.xpose.msra.mxu0 0
        %687 = vmatpush.bf16.xpose.msra.mxu0 0
        %688 = vmatpush.bf16.xpose.msra.mxu0 %v612
        %689 = vmatmul.bf16.gmra.mxu0 %v615
        %v690 = vpop.f32.mrf.mxu0
        %v691 = vadd.f32 %v679, %v690
        %v692 = vpop.f32.mrf.mxu0
        %v693 = vadd.f32 %v680, %v692
        %694 = vdwg.mxu0
        %695 = vmatpush.bf16.xpose.msra.mxu0 0
        %696 = vmatpush.bf16.xpose.msra.mxu0 0
        %697 = vmatpush.bf16.xpose.msra.mxu0 0
        %698 = vmatpush.bf16.xpose.msra.mxu0 0
        %699 = vmatpush.bf16.xpose.msra.mxu0 0
        %700 = vmatpush.bf16.xpose.msra.mxu0 0
        %701 = vmatpush.bf16.xpose.msra.mxu0 0
        %702 = vmatpush.bf16.xpose.msra.mxu0 %v642
        %703 = vmatmul.bf16.gmra.mxu0 %v645
        %v704 = vpop.f32.mrf.mxu0
        %v705 = vadd.f32 %v679, %v704
        %v706 = vpop.f32.mrf.mxu0
        %v707 = vadd.f32 %v680, %v706
        %708 = vdwg.mxu0
        %vm709 = vcmask 130048
        %v710 = vsel %vm709, %v691, 0.0
        %711 = vadd.xlane.f32.xlu0 %v710
        %v712 = vpop.xlane.xlu0 %711
        %v713 = vsel %vm709, %v693, 0.0
        %714 = vadd.xlane.f32.xlu0 %v713
        %v715 = vpop.xlane.xlu0 %714
        %v716 = vsel %vm709, %v705, 0.0
        %717 = vadd.xlane.f32.xlu0 %v716
        %v718 = vpop.xlane.xlu0 %717
        %v719 = vsel %vm709, %v707, 0.0
        %720 = vadd.xlane.f32.xlu0 %v719
        %v721 = vpop.xlane.xlu0 %720
        %v722 = vsel %vm709, %v627, 0.0
        %v723 = vsel %vm709, %v629, 0.0
        %v724 = vadd.f32 %v722, %v723
        %v725 = vrot.slane %v724, 4
        %v726 = vadd.f32 %v724, %v725
        %v727 = vrot.slane %v726, 2
        %v728 = vadd.f32 %v726, %v727
        %v729 = vrot.slane %v728, 1
        %v730 = vadd.f32 %v728, %v729
        %v731 = vsel %vm709, %v657, 0.0
        %v732 = vsel %vm709, %v659, 0.0
        %v733 = vadd.f32 %v731, %v732
        %v734 = vrot.slane %v733, 4
        %v735 = vadd.f32 %v733, %v734
        %v736 = vrot.slane %v735, 2
        %v737 = vadd.f32 %v735, %v736
        %v738 = vrot.slane %v737, 1
        %v739 = vadd.f32 %v737, %v738
        %v740 = vadd.f32 %v730, 1.0
        %v741 = vadd.f32 %v739, 1.0
        %v742 = vrsqrt.pop %v712
        %v743 = vmul.f32 %v742, %v712
        %v744 = vmul.f32 %v743, %v742
        %v745 = vmul.f32 0.5, %v744
        %v746 = vsub.f32 1.5, %v745
        %v747 = vmul.f32 %v742, %v746
        %vm748 = vweird.f32 %v712
        %vm749 = vweird.f32 %v742
        %vm750 = vmor %vm748, %vm749
        %v751 = vsel %vm750, %v742, %v747
        %v752 = vrsqrt.pop %v715
        %v753 = vmul.f32 %v752, %v715
        %v754 = vmul.f32 %v753, %v752
        %v755 = vmul.f32 0.5, %v754
        %v756 = vsub.f32 1.5, %v755
        %v757 = vmul.f32 %v752, %v756
        %vm758 = vweird.f32 %v715
        %vm759 = vweird.f32 %v752
        %vm760 = vmor %vm758, %vm759
        %v761 = vsel %vm760, %v752, %v757
        %v762 = vrsqrt.pop %v718
        %v763 = vmul.f32 %v762, %v718
        %v764 = vmul.f32 %v763, %v762
        %v765 = vmul.f32 0.5, %v764
        %v766 = vsub.f32 1.5, %v765
        %v767 = vmul.f32 %v762, %v766
        %vm768 = vweird.f32 %v718
        %vm769 = vweird.f32 %v762
        %vm770 = vmor %vm768, %vm769
        %v771 = vsel %vm770, %v762, %v767
        %v772 = vrsqrt.pop %v721
        %v773 = vmul.f32 %v772, %v721
        %v774 = vmul.f32 %v773, %v772
        %v775 = vmul.f32 0.5, %v774
        %v776 = vsub.f32 1.5, %v775
        %v777 = vmul.f32 %v772, %v776
        %vm778 = vweird.f32 %v721
        %vm779 = vweird.f32 %v772
        %vm780 = vmor %vm778, %vm779
        %v781 = vsel %vm780, %v772, %v777
        %v782 = vmul.f32 %v751, %v691
        %v783 = vmul.f32 %v761, %v693
        %v784 = vmul.f32 %v771, %v705
        %v785 = vmul.f32 %v781, %v707
        %v786 = vrsqrt.pop %v740
        %v787 = vmul.f32 %v786, %v740
        %v788 = vmul.f32 %v787, %v786
        %v789 = vmul.f32 0.5, %v788
        %v790 = vsub.f32 1.5, %v789
        %v791 = vmul.f32 %v786, %v790
        %vm792 = vweird.f32 %v740
        %vm793 = vweird.f32 %v786
        %vm794 = vmor %vm792, %vm793
        %v795 = vsel %vm794, %v786, %v791
        %v796 = vrsqrt.pop %v741
        %v797 = vmul.f32 %v796, %v741
        %v798 = vmul.f32 %v797, %v796
        %v799 = vmul.f32 0.5, %v798
        %v800 = vsub.f32 1.5, %v799
        %v801 = vmul.f32 %v796, %v800
        %vm802 = vweird.f32 %v741
        %vm803 = vweird.f32 %v796
        %vm804 = vmor %vm802, %vm803
        %v805 = vsel %vm804, %v796, %v801
        %v806 = vmul.f32 %v782, %v795
        %v807 = vmul.f32 %v783, %v795
        %v808 = vmul.f32 %v784, %v805
        %v809 = vmul.f32 %v785, %v805
        %v810 = vperm.slane %v355, 4
        %vm811 = vcmask 64512
        %v813 = vsel %vm811, %v349, 0
        %v816 = vsel %vm811, %v350, 0
        %v819 = vsel %vm811, %v351, 0
        %v822 = vsel %vm811, %v352, 0
        %824 = vmatpush.msra.mxu0 0.0
        %825 = vmatpush.msra.mxu0 0.0
        %826 = vmatpush.msra.mxu0 0.0
        %827 = vmatpush.msra.mxu0 0.0
        %828 = vmatpush.msra.mxu0 0.0
        %829 = vmatpush.msra.mxu0 0.0
        %830 = vmatpush.msra.mxu0 0.0
        %831 = vmatpush.msra.mxu0 0.0
        %832 = vmatpush.msra.mxu0 0.0
        %833 = vmatpush.msra.mxu0 0.0
        %834 = vmatpush.msra.mxu0 0.0
        %835 = vmatpush.msra.mxu0 0.0
        %836 = vmatpush.msra.mxu0 0.0
        %837 = vmatpush.msra.mxu0 0.0
        %838 = vmatpush.msra.mxu0 0.0
        %839 = vmatpush.msra.mxu0 %v360
        %840 = vmatmul.f32.gmra.mxu0 %v813
        %v841 = vpop.f32.mrf.mxu0
        %v842 = vadd.f32 %v810, %v841
        %843 = vmatmul.f32.gmra.mxu0 %v816
        %v844 = vpop.f32.mrf.mxu0
        %v845 = vadd.f32 %v810, %v844
        %846 = vmatmul.f32.gmra.mxu0 %v819
        %v847 = vpop.f32.mrf.mxu0
        %v848 = vadd.f32 %v810, %v847
        %849 = vmatmul.f32.gmra.mxu0 %v822
        %v850 = vpop.f32.mrf.mxu0
        %v851 = vadd.f32 %v810, %v850
        %852 = vdwg.mxu0
        %v854 = vsel %vm709, %v806, 0
        %v857 = vsel %vm709, %v807, 0
        %859 = vmatpush.msra.mxu0 0.0
        %860 = vmatpush.msra.mxu0 0.0
        %861 = vmatpush.msra.mxu0 0.0
        %862 = vmatpush.msra.mxu0 0.0
        %863 = vmatpush.msra.mxu0 0.0
        %864 = vmatpush.msra.mxu0 0.0
        %865 = vmatpush.msra.mxu0 0.0
        %866 = vmatpush.msra.mxu0 0.0
        %867 = vmatpush.msra.mxu0 0.0
        %868 = vmatpush.msra.mxu0 0.0
        %869 = vmatpush.msra.mxu0 0.0
        %870 = vmatpush.msra.mxu0 0.0
        %871 = vmatpush.msra.mxu0 0.0
        %872 = vmatpush.msra.mxu0 0.0
        %873 = vmatpush.msra.mxu0 %v350
        %874 = vmatpush.msra.mxu0 %v349
        %875 = vmatmul.f32.gmra.mxu0 %v854
        %v876 = vpop.f32.mrf.mxu0
        %v877 = vadd.f32 0.0, %v876
        %878 = vmatmul.f32.gmra.mxu0 %v857
        %v879 = vpop.f32.mrf.mxu0
        %v880 = vadd.f32 0.0, %v879
        %881 = vdwg.mxu0
        %v883 = vsel %vm709, %v808, 0
        %v886 = vsel %vm709, %v809, 0
        %888 = vmatpush.msra.mxu0 0.0
        %889 = vmatpush.msra.mxu0 0.0
        %890 = vmatpush.msra.mxu0 0.0
        %891 = vmatpush.msra.mxu0 0.0
        %892 = vmatpush.msra.mxu0 0.0
        %893 = vmatpush.msra.mxu0 0.0
        %894 = vmatpush.msra.mxu0 0.0
        %895 = vmatpush.msra.mxu0 0.0
        %896 = vmatpush.msra.mxu0 0.0
        %897 = vmatpush.msra.mxu0 0.0
        %898 = vmatpush.msra.mxu0 0.0
        %899 = vmatpush.msra.mxu0 0.0
        %900 = vmatpush.msra.mxu0 0.0
        %901 = vmatpush.msra.mxu0 0.0
        %902 = vmatpush.msra.mxu0 %v352
        %903 = vmatpush.msra.mxu0 %v351
        %904 = vmatmul.f32.gmra.mxu0 %v883
        %v905 = vpop.f32.mrf.mxu0
        %v906 = vadd.f32 0.0, %v905
        %907 = vmatmul.f32.gmra.mxu0 %v886
        %v908 = vpop.f32.mrf.mxu0
        %v909 = vadd.f32 0.0, %v908
        %910 = vdwg.mxu0
        %v911 = vperm.slane %v355, 0
        %v913 = vsel %vm811, %v877, 0
        %v916 = vsel %vm811, %v880, 0
        %v919 = vsel %vm811, %v906, 0
        %v922 = vsel %vm811, %v909, 0
        %924 = vmatpush.msra.mxu0 0.0
        %925 = vmatpush.msra.mxu0 0.0
        %926 = vmatpush.msra.mxu0 0.0
        %927 = vmatpush.msra.mxu0 0.0
        %928 = vmatpush.msra.mxu0 0.0
        %929 = vmatpush.msra.mxu0 0.0
        %930 = vmatpush.msra.mxu0 0.0
        %931 = vmatpush.msra.mxu0 0.0
        %932 = vmatpush.msra.mxu0 0.0
        %933 = vmatpush.msra.mxu0 0.0
        %934 = vmatpush.msra.mxu0 0.0
        %935 = vmatpush.msra.mxu0 0.0
        %936 = vmatpush.msra.mxu0 0.0
        %937 = vmatpush.msra.mxu0 0.0
        %938 = vmatpush.msra.mxu0 0.0
        %939 = vmatpush.msra.mxu0 %v359
        %940 = vmatmul.f32.gmra.mxu0 %v913
        %v941 = vpop.f32.mrf.mxu0
        %v942 = vadd.f32 %v911, %v941
        %943 = vmatmul.f32.gmra.mxu0 %v916
        %v944 = vpop.f32.mrf.mxu0
        %v945 = vadd.f32 %v911, %v944
        %946 = vmatmul.f32.gmra.mxu0 %v919
        %v947 = vpop.f32.mrf.mxu0
        %v948 = vadd.f32 %v911, %v947
        %949 = vmatmul.f32.gmra.mxu0 %v922
        %v950 = vpop.f32.mrf.mxu0
        %v951 = vadd.f32 %v911, %v950
        %952 = vdwg.mxu0
        %v953 = vmul.f32 %v942, 0.01
        %v954 = vmul.f32 %v945, 0.01
        %v955 = vmul.f32 %v948, 0.01
        %v956 = vmul.f32 %v951, 0.01
        %v957 = vmax.f32 %v942, %v953
        %v958 = vmax.f32 %v945, %v954
        %v959 = vmax.f32 %v948, %v955
        %v960 = vmax.f32 %v951, %v956
        %961 = vmatpush.msra.mxu0 0.0
        %962 = vmatpush.msra.mxu0 0.0
        %963 = vmatpush.msra.mxu0 0.0
        %964 = vmatpush.msra.mxu0 0.0
        %965 = vmatpush.msra.mxu0 0.0
        %966 = vmatpush.msra.mxu0 0.0
        %967 = vmatpush.msra.mxu0 0.0
        %968 = vmatpush.msra.mxu0 0.0
        %969 = vmatpush.msra.mxu0 0.0
        %970 = vmatpush.msra.mxu0 0.0
        %971 = vmatpush.msra.mxu0 0.0
        %972 = vmatpush.msra.mxu0 0.0
        %973 = vmatpush.msra.mxu0 0.0
        %974 = vmatpush.msra.mxu0 0.0
        %975 = vmatpush.msra.mxu0 %v958
        %976 = vmatpush.msra.mxu0 %v957
        %977 = vmatmul.f32.gmra.mxu0 %v854
        %v978 = vpop.f32.mrf.mxu0
        %v979 = vadd.f32 0.0, %v978
        %980 = vmatmul.f32.gmra.mxu0 %v857
        %v981 = vpop.f32.mrf.mxu0
        %v982 = vadd.f32 0.0, %v981
        %983 = vdwg.mxu0
        %984 = vmatpush.msra.mxu0 0.0
        %985 = vmatpush.msra.mxu0 0.0
        %986 = vmatpush.msra.mxu0 0.0
        %987 = vmatpush.msra.mxu0 0.0
        %988 = vmatpush.msra.mxu0 0.0
        %989 = vmatpush.msra.mxu0 0.0
        %990 = vmatpush.msra.mxu0 0.0
        %991 = vmatpush.msra.mxu0 0.0
        %992 = vmatpush.msra.mxu0 0.0
        %993 = vmatpush.msra.mxu0 0.0
        %994 = vmatpush.msra.mxu0 0.0
        %995 = vmatpush.msra.mxu0 0.0
        %996 = vmatpush.msra.mxu0 0.0
        %997 = vmatpush.msra.mxu0 0.0
        %998 = vmatpush.msra.mxu0 %v960
        %999 = vmatpush.msra.mxu0 %v959
        %1000 = vmatmul.f32.gmra.mxu0 %v883
        %v1001 = vpop.f32.mrf.mxu0
        %v1002 = vadd.f32 0.0, %v1001
        %1003 = vmatmul.f32.gmra.mxu0 %v886
        %v1004 = vpop.f32.mrf.mxu0
        %v1005 = vadd.f32 0.0, %v1004
        %1006 = vdwg.mxu0
        %v1007 = vperm.slane %v355, 1
        %v1008 = vperm.slane %v356, 1
        %1009 = vmatpush.msra.mxu0 %v391
        %1010 = vmatpush.msra.mxu0 %v389
        %1011 = vmatpush.msra.mxu0 %v387
        %1012 = vmatpush.msra.mxu0 %v385
        %1013 = vmatpush.msra.mxu0 %v383
        %1014 = vmatpush.msra.mxu0 %v381
        %1015 = vmatpush.msra.mxu0 %v379
        %1016 = vmatpush.msra.mxu0 %v377
        %1017 = vmatpush.msra.mxu0 %v375
        %1018 = vmatpush.msra.mxu0 %v373
        %1019 = vmatpush.msra.mxu0 %v371
        %1020 = vmatpush.msra.mxu0 %v369
        %1021 = vmatpush.msra.mxu0 %v367
        %1022 = vmatpush.msra.mxu0 %v365
        %1023 = vmatpush.msra.mxu0 %v363
        %1024 = vmatpush.msra.mxu0 %v361
        %1025 = vmatmul.f32.gmra.mxu0 %v979
        %v1026 = vpop.f32.mrf.mxu0
        %v1027 = vadd.f32 %v1007, %v1026
        %1028 = vmatmul.f32.gmra.mxu0 %v982
        %v1029 = vpop.f32.mrf.mxu0
        %v1030 = vadd.f32 %v1007, %v1029
        %1031 = vmatmul.f32.gmra.mxu0 %v1002
        %v1032 = vpop.f32.mrf.mxu0
        %v1033 = vadd.f32 %v1007, %v1032
        %1034 = vmatmul.f32.gmra.mxu0 %v1005
        %v1035 = vpop.f32.mrf.mxu0
        %v1036 = vadd.f32 %v1007, %v1035
        %1037 = vdwg.mxu0
        %1038 = vmatpush.msra.mxu0 %v392
        %1039 = vmatpush.msra.mxu0 %v390
        %1040 = vmatpush.msra.mxu0 %v388
        %1041 = vmatpush.msra.mxu0 %v386
        %1042 = vmatpush.msra.mxu0 %v384
        %1043 = vmatpush.msra.mxu0 %v382
        %1044 = vmatpush.msra.mxu0 %v380
        %1045 = vmatpush.msra.mxu0 %v378
        %1046 = vmatpush.msra.mxu0 %v376
        %1047 = vmatpush.msra.mxu0 %v374
        %1048 = vmatpush.msra.mxu0 %v372
        %1049 = vmatpush.msra.mxu0 %v370
        %1050 = vmatpush.msra.mxu0 %v368
        %1051 = vmatpush.msra.mxu0 %v366
        %1052 = vmatpush.msra.mxu0 %v364
        %1053 = vmatpush.msra.mxu0 %v362
        %1054 = vmatmul.f32.gmra.mxu0 %v979
        %v1055 = vpop.f32.mrf.mxu0
        %v1056 = vadd.f32 %v1008, %v1055
        %1057 = vmatmul.f32.gmra.mxu0 %v982
        %v1058 = vpop.f32.mrf.mxu0
        %v1059 = vadd.f32 %v1008, %v1058
        %1060 = vmatmul.f32.gmra.mxu0 %v1002
        %v1061 = vpop.f32.mrf.mxu0
        %v1062 = vadd.f32 %v1008, %v1061
        %1063 = vmatmul.f32.gmra.mxu0 %v1005
        %v1064 = vpop.f32.mrf.mxu0
        %v1065 = vadd.f32 %v1008, %v1064
        %1066 = vdwg.mxu0
        %v1067 = vmul.f32 %v1027, 0.01
        %v1068 = vmul.f32 %v1056, 0.01
        %v1069 = vmul.f32 %v1030, 0.01
        %v1070 = vmul.f32 %v1059, 0.01
        %v1071 = vmul.f32 %v1033, 0.01
        %v1072 = vmul.f32 %v1062, 0.01
        %v1073 = vmul.f32 %v1036, 0.01
        %v1074 = vmul.f32 %v1065, 0.01
        %v1075 = vmax.f32 %v1027, %v1067
        %v1076 = vmax.f32 %v1056, %v1068
        %v1077 = vmax.f32 %v1030, %v1069
        %v1078 = vmax.f32 %v1059, %v1070
        %v1079 = vmax.f32 %v1033, %v1071
        %v1080 = vmax.f32 %v1062, %v1072
        %v1081 = vmax.f32 %v1036, %v1073
        %v1082 = vmax.f32 %v1065, %v1074
        %v1083 = vperm.slane %v355, 2
        %v1084 = vperm.slane %v356, 2
        %v1085 = vperm.slane %v357, 2
        %v1086 = vperm.slane %v358, 2
        %1087 = vmatpush.msra.mxu0 %v453
        %1088 = vmatpush.msra.mxu0 %v449
        %1089 = vmatpush.msra.mxu0 %v445
        %1090 = vmatpush.msra.mxu0 %v441
        %1091 = vmatpush.msra.mxu0 %v437
        %1092 = vmatpush.msra.mxu0 %v433
        %1093 = vmatpush.msra.mxu0 %v429
        %1094 = vmatpush.msra.mxu0 %v425
        %1095 = vmatpush.msra.mxu0 %v421
        %1096 = vmatpush.msra.mxu0 %v417
        %1097 = vmatpush.msra.mxu0 %v413
        %1098 = vmatpush.msra.mxu0 %v409
        %1099 = vmatpush.msra.mxu0 %v405
        %1100 = vmatpush.msra.mxu0 %v401
        %1101 = vmatpush.msra.mxu0 %v397
        %1102 = vmatpush.msra.mxu0 %v393
        %1103 = vmatmul.f32.gmra.mxu0 %v1075
        %v1104 = vpop.f32.mrf.mxu0
        %v1105 = vadd.f32 %v1083, %v1104
        %1106 = vmatmul.f32.gmra.mxu0 %v1077
        %v1107 = vpop.f32.mrf.mxu0
        %v1108 = vadd.f32 %v1083, %v1107
        %1109 = vmatmul.f32.gmra.mxu0 %v1079
        %v1110 = vpop.f32.mrf.mxu0
        %v1111 = vadd.f32 %v1083, %v1110
        %1112 = vmatmul.f32.gmra.mxu0 %v1081
        %v1113 = vpop.f32.mrf.mxu0
        %v1114 = vadd.f32 %v1083, %v1113
        %1115 = vdwg.mxu0
        %1116 = vmatpush.msra.mxu0 %v517
        %1117 = vmatpush.msra.mxu0 %v513
        %1118 = vmatpush.msra.mxu0 %v509
        %1119 = vmatpush.msra.mxu0 %v505
        %1120 = vmatpush.msra.mxu0 %v501
        %1121 = vmatpush.msra.mxu0 %v497
        %1122 = vmatpush.msra.mxu0 %v493
        %1123 = vmatpush.msra.mxu0 %v489
        %1124 = vmatpush.msra.mxu0 %v485
        %1125 = vmatpush.msra.mxu0 %v481
        %1126 = vmatpush.msra.mxu0 %v477
        %1127 = vmatpush.msra.mxu0 %v473
        %1128 = vmatpush.msra.mxu0 %v469
        %1129 = vmatpush.msra.mxu0 %v465
        %1130 = vmatpush.msra.mxu0 %v461
        %1131 = vmatpush.msra.mxu0 %v457
        %1132 = vmatmul.f32.gmra.mxu0 %v1076
        %v1133 = vpop.f32.mrf.mxu0
        %v1134 = vadd.f32 %v1105, %v1133
        %1135 = vmatmul.f32.gmra.mxu0 %v1078
        %v1136 = vpop.f32.mrf.mxu0
        %v1137 = vadd.f32 %v1108, %v1136
        %1138 = vmatmul.f32.gmra.mxu0 %v1080
        %v1139 = vpop.f32.mrf.mxu0
        %v1140 = vadd.f32 %v1111, %v1139
        %1141 = vmatmul.f32.gmra.mxu0 %v1082
        %v1142 = vpop.f32.mrf.mxu0
        %v1143 = vadd.f32 %v1114, %v1142
        %1144 = vdwg.mxu0
        %1145 = vmatpush.msra.mxu0 %v454
        %1146 = vmatpush.msra.mxu0 %v450
        %1147 = vmatpush.msra.mxu0 %v446
        %1148 = vmatpush.msra.mxu0 %v442
        %1149 = vmatpush.msra.mxu0 %v438
        %1150 = vmatpush.msra.mxu0 %v434
        %1151 = vmatpush.msra.mxu0 %v430
        %1152 = vmatpush.msra.mxu0 %v426
        %1153 = vmatpush.msra.mxu0 %v422
        %1154 = vmatpush.msra.mxu0 %v418
        %1155 = vmatpush.msra.mxu0 %v414
        %1156 = vmatpush.msra.mxu0 %v410
        %1157 = vmatpush.msra.mxu0 %v406
        %1158 = vmatpush.msra.mxu0 %v402
        %1159 = vmatpush.msra.mxu0 %v398
        %1160 = vmatpush.msra.mxu0 %v394
        %1161 = vmatmul.f32.gmra.mxu0 %v1075
        %v1162 = vpop.f32.mrf.mxu0
        %v1163 = vadd.f32 %v1084, %v1162
        %1164 = vmatmul.f32.gmra.mxu0 %v1077
        %v1165 = vpop.f32.mrf.mxu0
        %v1166 = vadd.f32 %v1084, %v1165
        %1167 = vmatmul.f32.gmra.mxu0 %v1079
        %v1168 = vpop.f32.mrf.mxu0
        %v1169 = vadd.f32 %v1084, %v1168
        %1170 = vmatmul.f32.gmra.mxu0 %v1081
        %v1171 = vpop.f32.mrf.mxu0
        %v1172 = vadd.f32 %v1084, %v1171
        %1173 = vdwg.mxu0
        %1174 = vmatpush.msra.mxu0 %v518
        %1175 = vmatpush.msra.mxu0 %v514
        %1176 = vmatpush.msra.mxu0 %v510
        %1177 = vmatpush.msra.mxu0 %v506
        %1178 = vmatpush.msra.mxu0 %v502
        %1179 = vmatpush.msra.mxu0 %v498
        %1180 = vmatpush.msra.mxu0 %v494
        %1181 = vmatpush.msra.mxu0 %v490
        %1182 = vmatpush.msra.mxu0 %v486
        %1183 = vmatpush.msra.mxu0 %v482
        %1184 = vmatpush.msra.mxu0 %v478
        %1185 = vmatpush.msra.mxu0 %v474
        %1186 = vmatpush.msra.mxu0 %v470
        %1187 = vmatpush.msra.mxu0 %v466
        %1188 = vmatpush.msra.mxu0 %v462
        %1189 = vmatpush.msra.mxu0 %v458
        %1190 = vmatmul.f32.gmra.mxu0 %v1076
        %v1191 = vpop.f32.mrf.mxu0
        %v1192 = vadd.f32 %v1163, %v1191
        %1193 = vmatmul.f32.gmra.mxu0 %v1078
        %v1194 = vpop.f32.mrf.mxu0
        %v1195 = vadd.f32 %v1166, %v1194
        %1196 = vmatmul.f32.gmra.mxu0 %v1080
        %v1197 = vpop.f32.mrf.mxu0
        %v1198 = vadd.f32 %v1169, %v1197
        %1199 = vmatmul.f32.gmra.mxu0 %v1082
        %v1200 = vpop.f32.mrf.mxu0
        %v1201 = vadd.f32 %v1172, %v1200
        %1202 = vdwg.mxu0
        %1203 = vmatpush.msra.mxu0 %v455
        %1204 = vmatpush.msra.mxu0 %v451
        %1205 = vmatpush.msra.mxu0 %v447
        %1206 = vmatpush.msra.mxu0 %v443
        %1207 = vmatpush.msra.mxu0 %v439
        %1208 = vmatpush.msra.mxu0 %v435
        %1209 = vmatpush.msra.mxu0 %v431
        %1210 = vmatpush.msra.mxu0 %v427
        %1211 = vmatpush.msra.mxu0 %v423
        %1212 = vmatpush.msra.mxu0 %v419
        %1213 = vmatpush.msra.mxu0 %v415
        %1214 = vmatpush.msra.mxu0 %v411
        %1215 = vmatpush.msra.mxu0 %v407
        %1216 = vmatpush.msra.mxu0 %v403
        %1217 = vmatpush.msra.mxu0 %v399
        %1218 = vmatpush.msra.mxu0 %v395
        %1219 = vmatmul.f32.gmra.mxu0 %v1075
        %v1220 = vpop.f32.mrf.mxu0
        %v1221 = vadd.f32 %v1085, %v1220
        %1222 = vmatmul.f32.gmra.mxu0 %v1077
        %v1223 = vpop.f32.mrf.mxu0
        %v1224 = vadd.f32 %v1085, %v1223
        %1225 = vmatmul.f32.gmra.mxu0 %v1079
        %v1226 = vpop.f32.mrf.mxu0
        %v1227 = vadd.f32 %v1085, %v1226
        %1228 = vmatmul.f32.gmra.mxu0 %v1081
        %v1229 = vpop.f32.mrf.mxu0
        %v1230 = vadd.f32 %v1085, %v1229
        %1231 = vdwg.mxu0
        %1232 = vmatpush.msra.mxu0 %v519
        %1233 = vmatpush.msra.mxu0 %v515
        %1234 = vmatpush.msra.mxu0 %v511
        %1235 = vmatpush.msra.mxu0 %v507
        %1236 = vmatpush.msra.mxu0 %v503
        %1237 = vmatpush.msra.mxu0 %v499
        %1238 = vmatpush.msra.mxu0 %v495
        %1239 = vmatpush.msra.mxu0 %v491
        %1240 = vmatpush.msra.mxu0 %v487
        %1241 = vmatpush.msra.mxu0 %v483
        %1242 = vmatpush.msra.mxu0 %v479
        %1243 = vmatpush.msra.mxu0 %v475
        %1244 = vmatpush.msra.mxu0 %v471
        %1245 = vmatpush.msra.mxu0 %v467
        %1246 = vmatpush.msra.mxu0 %v463
        %1247 = vmatpush.msra.mxu0 %v459
        %1248 = vmatmul.f32.gmra.mxu0 %v1076
        %v1249 = vpop.f32.mrf.mxu0
        %v1250 = vadd.f32 %v1221, %v1249
        %1251 = vmatmul.f32.gmra.mxu0 %v1078
        %v1252 = vpop.f32.mrf.mxu0
        %v1253 = vadd.f32 %v1224, %v1252
        %1254 = vmatmul.f32.gmra.mxu0 %v1080
        %v1255 = vpop.f32.mrf.mxu0
        %v1256 = vadd.f32 %v1227, %v1255
        %1257 = vmatmul.f32.gmra.mxu0 %v1082
        %v1258 = vpop.f32.mrf.mxu0
        %v1259 = vadd.f32 %v1230, %v1258
        %1260 = vdwg.mxu0
        %1261 = vmatpush.msra.mxu0 %v456
        %1262 = vmatpush.msra.mxu0 %v452
        %1263 = vmatpush.msra.mxu0 %v448
        %1264 = vmatpush.msra.mxu0 %v444
        %1265 = vmatpush.msra.mxu0 %v440
        %1266 = vmatpush.msra.mxu0 %v436
        %1267 = vmatpush.msra.mxu0 %v432
        %1268 = vmatpush.msra.mxu0 %v428
        %1269 = vmatpush.msra.mxu0 %v424
        %1270 = vmatpush.msra.mxu0 %v420
        %1271 = vmatpush.msra.mxu0 %v416
        %1272 = vmatpush.msra.mxu0 %v412
        %1273 = vmatpush.msra.mxu0 %v408
        %1274 = vmatpush.msra.mxu0 %v404
        %1275 = vmatpush.msra.mxu0 %v400
        %1276 = vmatpush.msra.mxu0 %v396
        %1277 = vmatmul.f32.gmra.mxu0 %v1075
        %v1278 = vpop.f32.mrf.mxu0
        %v1279 = vadd.f32 %v1086, %v1278
        %1280 = vmatmul.f32.gmra.mxu0 %v1077
        %v1281 = vpop.f32.mrf.mxu0
        %v1282 = vadd.f32 %v1086, %v1281
        %1283 = vmatmul.f32.gmra.mxu0 %v1079
        %v1284 = vpop.f32.mrf.mxu0
        %v1285 = vadd.f32 %v1086, %v1284
        %1286 = vmatmul.f32.gmra.mxu0 %v1081
        %v1287 = vpop.f32.mrf.mxu0
        %v1288 = vadd.f32 %v1086, %v1287
        %1289 = vdwg.mxu0
        %1290 = vmatpush.msra.mxu0 %v520
        %1291 = vmatpush.msra.mxu0 %v516
        %1292 = vmatpush.msra.mxu0 %v512
        %1293 = vmatpush.msra.mxu0 %v508
        %1294 = vmatpush.msra.mxu0 %v504
        %1295 = vmatpush.msra.mxu0 %v500
        %1296 = vmatpush.msra.mxu0 %v496
        %1297 = vmatpush.msra.mxu0 %v492
        %1298 = vmatpush.msra.mxu0 %v488
        %1299 = vmatpush.msra.mxu0 %v484
        %1300 = vmatpush.msra.mxu0 %v480
        %1301 = vmatpush.msra.mxu0 %v476
        %1302 = vmatpush.msra.mxu0 %v472
        %1303 = vmatpush.msra.mxu0 %v468
        %1304 = vmatpush.msra.mxu0 %v464
        %1305 = vmatpush.msra.mxu0 %v460
        %1306 = vmatmul.f32.gmra.mxu0 %v1076
        %v1307 = vpop.f32.mrf.mxu0
        %v1308 = vadd.f32 %v1279, %v1307
        %1309 = vmatmul.f32.gmra.mxu0 %v1078
        %v1310 = vpop.f32.mrf.mxu0
        %v1311 = vadd.f32 %v1282, %v1310
        %1312 = vmatmul.f32.gmra.mxu0 %v1080
        %v1313 = vpop.f32.mrf.mxu0
        %v1314 = vadd.f32 %v1285, %v1313
        %1315 = vmatmul.f32.gmra.mxu0 %v1082
        %v1316 = vpop.f32.mrf.mxu0
        %v1317 = vadd.f32 %v1288, %v1316
        %1318 = vdwg.mxu0
        %1319 = vmatpush.xpose.msra.mxu0 0.0
        %1320 = vmatpush.xpose.msra.mxu0 0.0
        %1321 = vmatpush.xpose.msra.mxu0 0.0
        %1322 = vmatpush.xpose.msra.mxu0 0.0
        %1323 = vmatpush.xpose.msra.mxu0 0.0
        %1324 = vmatpush.xpose.msra.mxu0 0.0
        %1325 = vmatpush.xpose.msra.mxu0 0.0
        %1326 = vmatpush.xpose.msra.mxu0 0.0
        %1327 = vmatpush.xpose.msra.mxu0 0.0
        %1328 = vmatpush.xpose.msra.mxu0 0.0
        %1329 = vmatpush.xpose.msra.mxu0 0.0
        %1330 = vmatpush.xpose.msra.mxu0 0.0
        %1331 = vmatpush.xpose.msra.mxu0 0.0
        %1332 = vmatpush.xpose.msra.mxu0 0.0
        %1333 = vmatpush.xpose.msra.mxu0 %v1137
        %1334 = vmatpush.xpose.msra.mxu0 %v1134
        %1335 = vmatmul.f32.gmra.mxu0 %v1250
        %v1336 = vpop.f32.mrf.mxu0
        %v1337 = vadd.f32 0.0, %v1336
        %1338 = vmatmul.f32.gmra.mxu0 %v1253
        %v1339 = vpop.f32.mrf.mxu0
        %v1340 = vadd.f32 0.0, %v1339
        %1341 = vdwg.mxu0
        %1342 = vmatpush.xpose.msra.mxu0 0.0
        %1343 = vmatpush.xpose.msra.mxu0 0.0
        %1344 = vmatpush.xpose.msra.mxu0 0.0
        %1345 = vmatpush.xpose.msra.mxu0 0.0
        %1346 = vmatpush.xpose.msra.mxu0 0.0
        %1347 = vmatpush.xpose.msra.mxu0 0.0
        %1348 = vmatpush.xpose.msra.mxu0 0.0
        %1349 = vmatpush.xpose.msra.mxu0 0.0
        %1350 = vmatpush.xpose.msra.mxu0 0.0
        %1351 = vmatpush.xpose.msra.mxu0 0.0
        %1352 = vmatpush.xpose.msra.mxu0 0.0
        %1353 = vmatpush.xpose.msra.mxu0 0.0
        %1354 = vmatpush.xpose.msra.mxu0 0.0
        %1355 = vmatpush.xpose.msra.mxu0 0.0
        %1356 = vmatpush.xpose.msra.mxu0 %v1195
        %1357 = vmatpush.xpose.msra.mxu0 %v1192
        %1358 = vmatmul.f32.gmra.mxu0 %v1308
        %v1359 = vpop.f32.mrf.mxu0
        %v1360 = vadd.f32 %v1337, %v1359
        %1361 = vmatmul.f32.gmra.mxu0 %v1311
        %v1362 = vpop.f32.mrf.mxu0
        %v1363 = vadd.f32 %v1340, %v1362
        %1364 = vdwg.mxu0
        %1365 = vmatpush.xpose.msra.mxu0 0.0
        %1366 = vmatpush.xpose.msra.mxu0 0.0
        %1367 = vmatpush.xpose.msra.mxu0 0.0
        %1368 = vmatpush.xpose.msra.mxu0 0.0
        %1369 = vmatpush.xpose.msra.mxu0 0.0
        %1370 = vmatpush.xpose.msra.mxu0 0.0
        %1371 = vmatpush.xpose.msra.mxu0 0.0
        %1372 = vmatpush.xpose.msra.mxu0 0.0
        %1373 = vmatpush.xpose.msra.mxu0 0.0
        %1374 = vmatpush.xpose.msra.mxu0 0.0
        %1375 = vmatpush.xpose.msra.mxu0 0.0
        %1376 = vmatpush.xpose.msra.mxu0 0.0
        %1377 = vmatpush.xpose.msra.mxu0 0.0
        %1378 = vmatpush.xpose.msra.mxu0 0.0
        %1379 = vmatpush.xpose.msra.mxu0 %v1143
        %1380 = vmatpush.xpose.msra.mxu0 %v1140
        %1381 = vmatmul.f32.gmra.mxu0 %v1256
        %v1382 = vpop.f32.mrf.mxu0
        %v1383 = vadd.f32 0.0, %v1382
        %1384 = vmatmul.f32.gmra.mxu0 %v1259
        %v1385 = vpop.f32.mrf.mxu0
        %v1386 = vadd.f32 0.0, %v1385
        %1387 = vdwg.mxu0
        %1388 = vmatpush.xpose.msra.mxu0 0.0
        %1389 = vmatpush.xpose.msra.mxu0 0.0
        %1390 = vmatpush.xpose.msra.mxu0 0.0
        %1391 = vmatpush.xpose.msra.mxu0 0.0
        %1392 = vmatpush.xpose.msra.mxu0 0.0
        %1393 = vmatpush.xpose.msra.mxu0 0.0
        %1394 = vmatpush.xpose.msra.mxu0 0.0
        %1395 = vmatpush.xpose.msra.mxu0 0.0
        %1396 = vmatpush.xpose.msra.mxu0 0.0
        %1397 = vmatpush.xpose.msra.mxu0 0.0
        %1398 = vmatpush.xpose.msra.mxu0 0.0
        %1399 = vmatpush.xpose.msra.mxu0 0.0
        %1400 = vmatpush.xpose.msra.mxu0 0.0
        %1401 = vmatpush.xpose.msra.mxu0 0.0
        %1402 = vmatpush.xpose.msra.mxu0 %v1201
        %1403 = vmatpush.xpose.msra.mxu0 %v1198
        %1404 = vmatmul.f32.gmra.mxu0 %v1314
        %v1405 = vpop.f32.mrf.mxu0
        %v1406 = vadd.f32 %v1383, %v1405
        %1407 = vmatmul.f32.gmra.mxu0 %v1317
        %v1408 = vpop.f32.mrf.mxu0
        %v1409 = vadd.f32 %v1386, %v1408
        %1410 = vdwg.mxu0
        %v1411 = vmul.f32 %v1360, %v669
        %v1412 = vmul.f32 %v1363, %v670
        %v1413 = vmul.f32 %v1406, %v671
        %v1414 = vmul.f32 %v1409, %v672
        %v1415 = vsel %vm709, %v1411, -inf
        %1416 = vmax.xlane.f32.xlu0 %v1415
        %v1417 = vpop.xlane.xlu0 %1416
        %v1418 = vsel %vm709, %v1412, -inf
        %1419 = vmax.xlane.f32.xlu0 %v1418
        %v1420 = vpop.xlane.xlu0 %1419
        %v1421 = vsel %vm709, %v1413, -inf
        %1422 = vmax.xlane.f32.xlu0 %v1421
        %v1423 = vpop.xlane.xlu0 %1422
        %v1424 = vsel %vm709, %v1414, -inf
        %1425 = vmax.xlane.f32.xlu0 %v1424
        %v1426 = vpop.xlane.xlu0 %1425
        %v1427 = vsub.f32 %v1411, %v1417
        %v1428 = vsub.f32 %v1412, %v1420
        %v1429 = vsub.f32 %v1413, %v1423
        %v1430 = vsub.f32 %v1414, %v1426
        %v1431 = vmul.f32 %v1427, 1.442695
        %v1432 = vpow.pop %v1431
        %v1433 = vmul.f32 %v1428, 1.442695
        %v1434 = vpow.pop %v1433
        %v1435 = vmul.f32 %v1429, 1.442695
        %v1436 = vpow.pop %v1435
        %v1437 = vmul.f32 %v1430, 1.442695
        %v1438 = vpow.pop %v1437
        %v1439 = vsel %vm709, %v1432, 0.0
        %1440 = vadd.xlane.f32.xlu0 %v1439
        %v1441 = vpop.xlane.xlu0 %1440
        %v1442 = vsel %vm709, %v1434, 0.0
        %1443 = vadd.xlane.f32.xlu0 %v1442
        %v1444 = vpop.xlane.xlu0 %1443
        %v1445 = vsel %vm709, %v1436, 0.0
        %1446 = vadd.xlane.f32.xlu0 %v1445
        %v1447 = vpop.xlane.xlu0 %1446
        %v1448 = vsel %vm709, %v1438, 0.0
        %1449 = vadd.xlane.f32.xlu0 %v1448
        %v1450 = vpop.xlane.xlu0 %1449
        %v1451 = vrcp.pop %v1441
        %v1452 = vmul.f32 %v1441, %v1451
        %v1453 = vsub.f32 1.0, %v1452
        %v1454 = vmul.f32 %v1451, %v1453
        %v1455 = vadd.f32 %v1451, %v1454
        %vm1456 = vweird.f32 %v1441
        %vm1457 = vweird.f32 %v1451
        %vm1458 = vmor %vm1456, %vm1457
        %v1459 = vsel %vm1458, %v1451, %v1455
        %v1460 = vand.u32 2147483647, %v1441
        %vm1461 = vcmp.eq.f32.partialorder %v1460, 8.507059e+37
        %v1462 = vand.u32 %v1441, 2147483648
        %v1463 = vor.u32 1.1754944e-38, %v1462
        %v1464 = vsel %vm1461, %v1463, %v1459
        %v1465 = vmul.f32 %v1432, %v1464
        %v1466 = vrcp.pop %v1444
        %v1467 = vmul.f32 %v1444, %v1466
        %v1468 = vsub.f32 1.0, %v1467
        %v1469 = vmul.f32 %v1466, %v1468
        %v1470 = vadd.f32 %v1466, %v1469
        %vm1471 = vweird.f32 %v1444
        %vm1472 = vweird.f32 %v1466
        %vm1473 = vmor %vm1471, %vm1472
        %v1474 = vsel %vm1473, %v1466, %v1470
        %v1475 = vand.u32 2147483647, %v1444
        %vm1476 = vcmp.eq.f32.partialorder %v1475, 8.507059e+37
        %v1477 = vand.u32 %v1444, 2147483648
        %v1478 = vor.u32 1.1754944e-38, %v1477
        %v1479 = vsel %vm1476, %v1478, %v1474
        %v1480 = vmul.f32 %v1434, %v1479
        %v1481 = vrcp.pop %v1447
        %v1482 = vmul.f32 %v1447, %v1481
        %v1483 = vsub.f32 1.0, %v1482
        %v1484 = vmul.f32 %v1481, %v1483
        %v1485 = vadd.f32 %v1481, %v1484
        %vm1486 = vweird.f32 %v1447
        %vm1487 = vweird.f32 %v1481
        %vm1488 = vmor %vm1486, %vm1487
        %v1489 = vsel %vm1488, %v1481, %v1485
        %v1490 = vand.u32 2147483647, %v1447
        %vm1491 = vcmp.eq.f32.partialorder %v1490, 8.507059e+37
        %v1492 = vand.u32 %v1447, 2147483648
        %v1493 = vor.u32 1.1754944e-38, %v1492
        %v1494 = vsel %vm1491, %v1493, %v1489
        %v1495 = vmul.f32 %v1436, %v1494
        %v1496 = vrcp.pop %v1450
        %v1497 = vmul.f32 %v1450, %v1496
        %v1498 = vsub.f32 1.0, %v1497
        %v1499 = vmul.f32 %v1496, %v1498
        %v1500 = vadd.f32 %v1496, %v1499
        %vm1501 = vweird.f32 %v1450
        %vm1502 = vweird.f32 %v1496
        %vm1503 = vmor %vm1501, %vm1502
        %v1504 = vsel %vm1503, %v1496, %v1500
        %v1505 = vand.u32 2147483647, %v1450
        %vm1506 = vcmp.eq.f32.partialorder %v1505, 8.507059e+37
        %v1507 = vand.u32 %v1450, 2147483648
        %v1508 = vor.u32 1.1754944e-38, %v1507
        %v1509 = vsel %vm1506, %v1508, %v1504
        %v1510 = vmul.f32 %v1438, %v1509
        %v1512 = vsel %vm709, %v1465, 0
        %v1515 = vsel %vm709, %v1480, 0
        %1517 = vmatpush.msra.mxu0 0.0
        %1518 = vmatpush.msra.mxu0 0.0
        %1519 = vmatpush.msra.mxu0 0.0
        %1520 = vmatpush.msra.mxu0 0.0
        %1521 = vmatpush.msra.mxu0 0.0
        %1522 = vmatpush.msra.mxu0 0.0
        %1523 = vmatpush.msra.mxu0 0.0
        %1524 = vmatpush.msra.mxu0 0.0
        %1525 = vmatpush.msra.mxu0 0.0
        %1526 = vmatpush.msra.mxu0 0.0
        %1527 = vmatpush.msra.mxu0 0.0
        %1528 = vmatpush.msra.mxu0 0.0
        %1529 = vmatpush.msra.mxu0 0.0
        %1530 = vmatpush.msra.mxu0 0.0
        %1531 = vmatpush.msra.mxu0 %v1077
        %1532 = vmatpush.msra.mxu0 %v1075
        %1533 = vmatmul.f32.gmra.mxu0 %v1512
        %v1534 = vpop.f32.mrf.mxu0
        %v1535 = vadd.f32 0.0, %v1534
        %1536 = vmatmul.f32.gmra.mxu0 %v1515
        %v1537 = vpop.f32.mrf.mxu0
        %v1538 = vadd.f32 0.0, %v1537
        %1539 = vdwg.mxu0
        %1540 = vmatpush.msra.mxu0 0.0
        %1541 = vmatpush.msra.mxu0 0.0
        %1542 = vmatpush.msra.mxu0 0.0
        %1543 = vmatpush.msra.mxu0 0.0
        %1544 = vmatpush.msra.mxu0 0.0
        %1545 = vmatpush.msra.mxu0 0.0
        %1546 = vmatpush.msra.mxu0 0.0
        %1547 = vmatpush.msra.mxu0 0.0
        %1548 = vmatpush.msra.mxu0 0.0
        %1549 = vmatpush.msra.mxu0 0.0
        %1550 = vmatpush.msra.mxu0 0.0
        %1551 = vmatpush.msra.mxu0 0.0
        %1552 = vmatpush.msra.mxu0 0.0
        %1553 = vmatpush.msra.mxu0 0.0
        %1554 = vmatpush.msra.mxu0 %v1078
        %1555 = vmatpush.msra.mxu0 %v1076
        %1556 = vmatmul.f32.gmra.mxu0 %v1512
        %v1557 = vpop.f32.mrf.mxu0
        %v1558 = vadd.f32 0.0, %v1557
        %1559 = vmatmul.f32.gmra.mxu0 %v1515
        %v1560 = vpop.f32.mrf.mxu0
        %v1561 = vadd.f32 0.0, %v1560
        %1562 = vdwg.mxu0
        %v1564 = vsel %vm709, %v1495, 0
        %v1567 = vsel %vm709, %v1510, 0
        %1569 = vmatpush.msra.mxu0 0.0
        %1570 = vmatpush.msra.mxu0 0.0
        %1571 = vmatpush.msra.mxu0 0.0
        %1572 = vmatpush.msra.mxu0 0.0
        %1573 = vmatpush.msra.mxu0 0.0
        %1574 = vmatpush.msra.mxu0 0.0
        %1575 = vmatpush.msra.mxu0 0.0
        %1576 = vmatpush.msra.mxu0 0.0
        %1577 = vmatpush.msra.mxu0 0.0
        %1578 = vmatpush.msra.mxu0 0.0
        %1579 = vmatpush.msra.mxu0 0.0
        %1580 = vmatpush.msra.mxu0 0.0
        %1581 = vmatpush.msra.mxu0 0.0
        %1582 = vmatpush.msra.mxu0 0.0
        %1583 = vmatpush.msra.mxu0 %v1081
        %1584 = vmatpush.msra.mxu0 %v1079
        %1585 = vmatmul.f32.gmra.mxu0 %v1564
        %v1586 = vpop.f32.mrf.mxu0
        %v1587 = vadd.f32 0.0, %v1586
        %1588 = vmatmul.f32.gmra.mxu0 %v1567
        %v1589 = vpop.f32.mrf.mxu0
        %v1590 = vadd.f32 0.0, %v1589
        %1591 = vdwg.mxu0
        %1592 = vmatpush.msra.mxu0 0.0
        %1593 = vmatpush.msra.mxu0 0.0
        %1594 = vmatpush.msra.mxu0 0.0
        %1595 = vmatpush.msra.mxu0 0.0
        %1596 = vmatpush.msra.mxu0 0.0
        %1597 = vmatpush.msra.mxu0 0.0
        %1598 = vmatpush.msra.mxu0 0.0
        %1599 = vmatpush.msra.mxu0 0.0
        %1600 = vmatpush.msra.mxu0 0.0
        %1601 = vmatpush.msra.mxu0 0.0
        %1602 = vmatpush.msra.mxu0 0.0
        %1603 = vmatpush.msra.mxu0 0.0
        %1604 = vmatpush.msra.mxu0 0.0
        %1605 = vmatpush.msra.mxu0 0.0
        %1606 = vmatpush.msra.mxu0 %v1082
        %1607 = vmatpush.msra.mxu0 %v1080
        %1608 = vmatmul.f32.gmra.mxu0 %v1564
        %v1609 = vpop.f32.mrf.mxu0
        %v1610 = vadd.f32 0.0, %v1609
        %1611 = vmatmul.f32.gmra.mxu0 %v1567
        %v1612 = vpop.f32.mrf.mxu0
        %v1613 = vadd.f32 0.0, %v1612
        %1614 = vdwg.mxu0
        %1615 = vmatpush.msra.mxu0 %v536
        %1616 = vmatpush.msra.mxu0 %v535
        %1617 = vmatpush.msra.mxu0 %v534
        %1618 = vmatpush.msra.mxu0 %v533
        %1619 = vmatpush.msra.mxu0 %v532
        %1620 = vmatpush.msra.mxu0 %v531
        %1621 = vmatpush.msra.mxu0 %v530
        %1622 = vmatpush.msra.mxu0 %v529
        %1623 = vmatpush.msra.mxu0 %v528
        %1624 = vmatpush.msra.mxu0 %v527
        %1625 = vmatpush.msra.mxu0 %v526
        %1626 = vmatpush.msra.mxu0 %v525
        %1627 = vmatpush.msra.mxu0 %v524
        %1628 = vmatpush.msra.mxu0 %v523
        %1629 = vmatpush.msra.mxu0 %v522
        %1630 = vmatpush.msra.mxu0 %v521
        %1631 = vmatmul.f32.gmra.mxu0 %v1535
        %v1632 = vpop.f32.mrf.mxu0
        %v1633 = vadd.f32 0.0, %v1632
        %1634 = vmatmul.f32.gmra.mxu0 %v1538
        %v1635 = vpop.f32.mrf.mxu0
        %v1636 = vadd.f32 0.0, %v1635
        %1637 = vmatmul.f32.gmra.mxu0 %v1587
        %v1638 = vpop.f32.mrf.mxu0
        %v1639 = vadd.f32 0.0, %v1638
        %1640 = vmatmul.f32.gmra.mxu0 %v1590
        %v1641 = vpop.f32.mrf.mxu0
        %v1642 = vadd.f32 0.0, %v1641
        %1643 = vdwg.mxu0
        %1644 = vmatpush.msra.mxu0 %v552
        %1645 = vmatpush.msra.mxu0 %v551
        %1646 = vmatpush.msra.mxu0 %v550
        %1647 = vmatpush.msra.mxu0 %v549
        %1648 = vmatpush.msra.mxu0 %v548
        %1649 = vmatpush.msra.mxu0 %v547
        %1650 = vmatpush.msra.mxu0 %v546
        %1651 = vmatpush.msra.mxu0 %v545
        %1652 = vmatpush.msra.mxu0 %v544
        %1653 = vmatpush.msra.mxu0 %v543
        %1654 = vmatpush.msra.mxu0 %v542
        %1655 = vmatpush.msra.mxu0 %v541
        %1656 = vmatpush.msra.mxu0 %v540
        %1657 = vmatpush.msra.mxu0 %v539
        %1658 = vmatpush.msra.mxu0 %v538
        %1659 = vmatpush.msra.mxu0 %v537
        %1660 = vmatmul.f32.gmra.mxu0 %v1558
        %v1661 = vpop.f32.mrf.mxu0
        %v1662 = vadd.f32 %v1633, %v1661
        %1663 = vmatmul.f32.gmra.mxu0 %v1561
        %v1664 = vpop.f32.mrf.mxu0
        %v1665 = vadd.f32 %v1636, %v1664
        %1666 = vmatmul.f32.gmra.mxu0 %v1610
        %v1667 = vpop.f32.mrf.mxu0
        %v1668 = vadd.f32 %v1639, %v1667
        %1669 = vmatmul.f32.gmra.mxu0 %v1613
        %v1670 = vpop.f32.mrf.mxu0
        %v1671 = vadd.f32 %v1642, %v1670
        %1672 = vdwg.mxu0
        %1673 = vmatpush.msra.mxu0 0.0
        %1674 = vmatpush.msra.mxu0 0.0
        %1675 = vmatpush.msra.mxu0 0.0
        %1676 = vmatpush.msra.mxu0 0.0
        %1677 = vmatpush.msra.mxu0 0.0
        %1678 = vmatpush.msra.mxu0 0.0
        %1679 = vmatpush.msra.mxu0 0.0
        %1680 = vmatpush.msra.mxu0 0.0
        %1681 = vmatpush.msra.mxu0 0.0
        %1682 = vmatpush.msra.mxu0 0.0
        %1683 = vmatpush.msra.mxu0 0.0
        %1684 = vmatpush.msra.mxu0 0.0
        %1685 = vmatpush.msra.mxu0 0.0
        %1686 = vmatpush.msra.mxu0 0.0
        %1687 = vmatpush.msra.mxu0 %v1665
        %1688 = vmatpush.msra.mxu0 %v1662
        %1689 = vmatmul.f32.gmra.mxu0 %v854
        %v1690 = vpop.f32.mrf.mxu0
        %v1691 = vadd.f32 0.0, %v1690
        %1692 = vmatmul.f32.gmra.mxu0 %v857
        %v1693 = vpop.f32.mrf.mxu0
        %v1694 = vadd.f32 0.0, %v1693
        %1695 = vdwg.mxu0
        %1696 = vmatpush.msra.mxu0 0.0
        %1697 = vmatpush.msra.mxu0 0.0
        %1698 = vmatpush.msra.mxu0 0.0
        %1699 = vmatpush.msra.mxu0 0.0
        %1700 = vmatpush.msra.mxu0 0.0
        %1701 = vmatpush.msra.mxu0 0.0
        %1702 = vmatpush.msra.mxu0 0.0
        %1703 = vmatpush.msra.mxu0 0.0
        %1704 = vmatpush.msra.mxu0 0.0
        %1705 = vmatpush.msra.mxu0 0.0
        %1706 = vmatpush.msra.mxu0 0.0
        %1707 = vmatpush.msra.mxu0 0.0
        %1708 = vmatpush.msra.mxu0 0.0
        %1709 = vmatpush.msra.mxu0 0.0
        %1710 = vmatpush.msra.mxu0 %v1671
        %1711 = vmatpush.msra.mxu0 %v1668
        %1712 = vmatmul.f32.gmra.mxu0 %v883
        %v1713 = vpop.f32.mrf.mxu0
        %v1714 = vadd.f32 0.0, %v1713
        %1715 = vmatmul.f32.gmra.mxu0 %v886
        %v1716 = vpop.f32.mrf.mxu0
        %v1717 = vadd.f32 0.0, %v1716
        %1718 = vdwg.mxu0
        %v1719 = vperm.slane %v355, 3
        %v1720 = vadd.f32 %v1691, %v1719
        %v1721 = vadd.f32 %v1694, %v1719
        %v1722 = vadd.f32 %v1714, %v1719
        %v1723 = vadd.f32 %v1717, %v1719
        %v1724 = vmul.f32 %v1720, 0.01
        %v1725 = vmul.f32 %v1721, 0.01
        %v1726 = vmul.f32 %v1722, 0.01
        %v1727 = vmul.f32 %v1723, 0.01
        %v1728 = vmax.f32 %v1720, %v1724
        %v1729 = vmax.f32 %v1721, %v1725
        %v1730 = vmax.f32 %v1722, %v1726
        %v1731 = vmax.f32 %v1723, %v1727
        %v1732 = vadd.f32 %v1728, %v842
        %v1733 = vadd.f32 %v1729, %v845
        %v1734 = vadd.f32 %v1730, %v848
        %v1735 = vadd.f32 %v1731, %v851
        %vm1736 = vcmask 523264
        %v1737 = vsel %vm1736, %v1732, 0.0
        %1738 = vadd.xlane.f32.xlu0 %v1737
        %v1739 = vpop.xlane.xlu0 %1738
        %v1740 = vsel %vm1736, %v1733, 0.0
        %1741 = vadd.xlane.f32.xlu0 %v1740
        %v1742 = vpop.xlane.xlu0 %1741
        %v1743 = vsel %vm1736, %v1734, 0.0
        %1744 = vadd.xlane.f32.xlu0 %v1743
        %v1745 = vpop.xlane.xlu0 %1744
        %v1746 = vsel %vm1736, %v1735, 0.0
        %1747 = vadd.xlane.f32.xlu0 %v1746
        %v1748 = vpop.xlane.xlu0 %1747
        %v1749 = vrcp.pop 64.0
        %v1750 = vmul.f32 64.0, %v1749
        %v1751 = vsub.f32 1.0, %v1750
        %v1752 = vmul.f32 %v1749, %v1751
        %v1753 = vadd.f32 %v1749, %v1752
        %vm1754 = vweird.f32 %v1749
        %v1755 = vsel %vm1754, %v1749, %v1753
        %v1756 = vmul.f32 %v1739, %v1755
        %v1757 = vmul.f32 %v1742, %v1755
        %v1758 = vmul.f32 %v1745, %v1755
        %v1759 = vmul.f32 %v1748, %v1755
        %v1760 = vsub.f32 %v1732, %v1756
        %v1761 = vsub.f32 %v1733, %v1757
        %v1762 = vsub.f32 %v1734, %v1758
        %v1763 = vsub.f32 %v1735, %v1759
        %v1764 = vmul.f32 %v1760, %v1760
        %v1765 = vmul.f32 %v1761, %v1761
        %v1766 = vmul.f32 %v1762, %v1762
        %v1767 = vmul.f32 %v1763, %v1763
        %v1768 = vsel %vm1736, %v1764, 0.0
        %1769 = vadd.xlane.f32.xlu0 %v1768
        %v1770 = vpop.xlane.xlu0 %1769
        %v1771 = vsel %vm1736, %v1765, 0.0
        %1772 = vadd.xlane.f32.xlu0 %v1771
        %v1773 = vpop.xlane.xlu0 %1772
        %v1774 = vsel %vm1736, %v1766, 0.0
        %1775 = vadd.xlane.f32.xlu0 %v1774
        %v1776 = vpop.xlane.xlu0 %1775
        %v1777 = vsel %vm1736, %v1767, 0.0
        %1778 = vadd.xlane.f32.xlu0 %v1777
        %v1779 = vpop.xlane.xlu0 %1778
        %v1780 = vmul.f32 %v1770, %v1755
        %v1781 = vmul.f32 %v1773, %v1755
        %v1782 = vmul.f32 %v1776, %v1755
        %v1783 = vmul.f32 %v1779, %v1755
        %v1784 = vadd.f32 %v1780, 1e-05
        %v1785 = vadd.f32 %v1781, 1e-05
        %v1786 = vadd.f32 %v1782, 1e-05
        %v1787 = vadd.f32 %v1783, 1e-05
        %v1788 = vrsqrt.pop %v1784
        %v1789 = vmul.f32 %v1788, %v1784
        %v1790 = vmul.f32 %v1789, %v1788
        %v1791 = vmul.f32 0.5, %v1790
        %v1792 = vsub.f32 1.5, %v1791
        %v1793 = vmul.f32 %v1788, %v1792
        %vm1794 = vweird.f32 %v1784
        %vm1795 = vweird.f32 %v1788
        %vm1796 = vmor %vm1794, %vm1795
        %v1797 = vsel %vm1796, %v1788, %v1793
        %v1798 = vrsqrt.pop %v1785
        %v1799 = vmul.f32 %v1798, %v1785
        %v1800 = vmul.f32 %v1799, %v1798
        %v1801 = vmul.f32 0.5, %v1800
        %v1802 = vsub.f32 1.5, %v1801
        %v1803 = vmul.f32 %v1798, %v1802
        %vm1804 = vweird.f32 %v1785
        %vm1805 = vweird.f32 %v1798
        %vm1806 = vmor %vm1804, %vm1805
        %v1807 = vsel %vm1806, %v1798, %v1803
        %v1808 = vrsqrt.pop %v1786
        %v1809 = vmul.f32 %v1808, %v1786
        %v1810 = vmul.f32 %v1809, %v1808
        %v1811 = vmul.f32 0.5, %v1810
        %v1812 = vsub.f32 1.5, %v1811
        %v1813 = vmul.f32 %v1808, %v1812
        %vm1814 = vweird.f32 %v1786
        %vm1815 = vweird.f32 %v1808
        %vm1816 = vmor %vm1814, %vm1815
        %v1817 = vsel %vm1816, %v1808, %v1813
        %v1818 = vrsqrt.pop %v1787
        %v1819 = vmul.f32 %v1818, %v1787
        %v1820 = vmul.f32 %v1819, %v1818
        %v1821 = vmul.f32 0.5, %v1820
        %v1822 = vsub.f32 1.5, %v1821
        %v1823 = vmul.f32 %v1818, %v1822
        %vm1824 = vweird.f32 %v1787
        %vm1825 = vweird.f32 %v1818
        %vm1826 = vmor %vm1824, %vm1825
        %v1827 = vsel %vm1826, %v1818, %v1823
        %v1828 = vmul.f32 %v1760, %v1797
        %v1829 = vmul.f32 %v1761, %v1807
        %v1830 = vmul.f32 %v1762, %v1817
        %v1831 = vmul.f32 %v1763, %v1827
        %v1832 = vperm.slane %v355, 5
        %v1833 = vmul.f32 %v1828, %v1832
        %v1834 = vmul.f32 %v1829, %v1832
        %v1835 = vmul.f32 %v1830, %v1832
        %v1836 = vmul.f32 %v1831, %v1832
        %v1837 = vperm.slane %v355, 6
        %v1838 = vadd.f32 %v1833, %v1837
        %v1839 = vadd.f32 %v1834, %v1837
        %v1840 = vadd.f32 %v1835, %v1837
        %v1841 = vadd.f32 %v1836, %v1837
        %v1842 = vsel %vm1736, %v1838, -inf
        %v1843 = vsel %vm1736, %v1839, -inf
        %v1844 = vmax.f32 %v1842, %v1843
        %v1845 = vrot.slane %v1844, 4
        %v1846 = vmax.f32 %v1844, %v1845
        %v1847 = vrot.slane %v1846, 2
        %v1848 = vmax.f32 %v1846, %v1847
        %v1849 = vrot.slane %v1848, 1
        %v1850 = vmax.f32 %v1848, %v1849
        %v1851 = vsel %vm1736, %v1840, -inf
        %v1852 = vsel %vm1736, %v1841, -inf
        %v1853 = vmax.f32 %v1851, %v1852
        %v1854 = vrot.slane %v1853, 4
        %v1855 = vmax.f32 %v1853, %v1854
        %v1856 = vrot.slane %v1855, 2
        %v1857 = vmax.f32 %v1855, %v1856
        %v1858 = vrot.slane %v1857, 1
        %v1859 = vmax.f32 %v1857, %v1858
        %v1860 = vperm.slane %v355, 7
        %vm1863 = vcmask 1041409
        %v1864 = vsel %vm1863, %v1859, %v1850
        %v1865 = vsel %vm1736, %v1864, 0
        %1867 = vmatpush.msra.mxu0 0.0
        %1868 = vmatpush.msra.mxu0 0.0
        %1869 = vmatpush.msra.mxu0 0.0
        %1870 = vmatpush.msra.mxu0 0.0
        %1871 = vmatpush.msra.mxu0 0.0
        %1872 = vmatpush.msra.mxu0 0.0
        %1873 = vmatpush.msra.mxu0 0.0
        %1874 = vmatpush.msra.mxu0 0.0
        %1875 = vmatpush.msra.mxu0 %v560
        %1876 = vmatpush.msra.mxu0 %v559
        %1877 = vmatpush.msra.mxu0 %v558
        %1878 = vmatpush.msra.mxu0 %v557
        %1879 = vmatpush.msra.mxu0 %v556
        %1880 = vmatpush.msra.mxu0 %v555
        %1881 = vmatpush.msra.mxu0 %v554
        %1882 = vmatpush.msra.mxu0 %v553
        %1883 = vmatmul.f32.gmra.mxu0 %v1865
        %v1884 = vpop.f32.mrf.mxu0
        %v1885 = vadd.f32 %v1860, %v1884
        %1886 = vdwg.mxu0
        %1887 = vst [vmem:[%s334] sm:$0x3] %v1885
        %s1888 = sand.u32 %s209, 1
        %s1889 = scalar_lea.sflag [#allocation4], %s1888
        %s1890 = sand.u32 %s209, 1
        %s1891 = smul.addr %s1890, 2
        %s1892 = scalar_lea.vmem [#allocation5], %s1891
        // Predicated region
        $region57: #{tpu_custom_call.1} parent=51 // pred_check
          %p1893 = pneg %p219
        $region58: #{tpu_custom_call.1} parent=51 // pred_check_branch
          %1895 = sbr.rel (%p1893) target = $region60
        $region59: #{tpu_custom_call.1} parent=51 // pred_region
          %1897 = vsyncadd %s1889, 0
          %s1898 = smul.addr %s23, 2
          %s1899 = scalar_lea.hbm %s8, %s1898
          %s1901 = sshll.u32 %s1892, 4
          %s1902 = int_to_ptr.vmem [resolvable:$true] %s1901
          %s1903 = sshll.u32 %s1899, 4
          %s1904 = int_to_ptr.hbm [resolvable:$true] %s1903
          %1906 = dma.vmem_to_hbm [thread:$0]  %s1902, 32, %s1904, %s1889
        $region60: #{tpu_custom_call.1} parent=51 // pred_fallthru
          _
      $region52: #{tpu_custom_call.1} parent=5 // pred_fallthru
        _
      %p1907 = scmp.le.s32.totalorder 2, %s18
      // Predicated region
      $region61: #{tpu_custom_call.1} parent=5 // pred_check
        %p1908 = pneg %p1907
      $region62: #{tpu_custom_call.1} parent=5 // pred_check_branch
        %1910 = sbr.rel (%p1908) target = $region64
      $region63: #{tpu_custom_call.1} parent=5 // pred_region
        %s1911 = ssub.s32 %s18, 2
        // Predicated region
        $region65: #{tpu_custom_call.1} parent=63 // pred_check
          %p1912 = pneg %p225
        $region66: #{tpu_custom_call.1} parent=63 // pred_check_branch
          %1914 = sbr.rel (%p1912) target = $region68
        $region67: #{tpu_custom_call.1} parent=63 // pred_region
          %s1915 = sand.u32 %s210, 1
          %s1916 = scalar_lea.sflag [#allocation4], %s1915
          %s1917 = sand.u32 %s210, 1
          %s1918 = smul.addr %s1917, 2
          %s1919 = scalar_lea.vmem [#allocation5], %s1918
          %1921 = dma.done %s1916, 32
        $region68: #{tpu_custom_call.1} parent=63 // pred_fallthru
          _
      $region64: #{tpu_custom_call.1} parent=5 // pred_fallthru
        _
    $region6: #{tpu_custom_call.1} parent=1 // loop_footer
      %s22 = sadd.s32 1, %s18
    $region7: #{tpu_custom_call.1} parent=1 // loop_footer_branch
      %17 = sbr.rel target = $region3
    $region8: #{tpu_custom_call.1} parent=1 // loop_exit
      _
    %1922 = vsyncpa [#allocation3], 1
    %s1923 = scalar_lea.sflag [#allocation3], 1
    %1924 = vsyncpa %s1923, 1
    %1925 = vsyncpa [#allocation4], 1
    %s1926 = scalar_lea.sflag [#allocation4], 1
    %1927 = vsyncpa %s1926, 1

</llo_original>
